<compile_context>
chip_gen: v7x
topology: tpu7x:2x2x1
jax: 0.10.0
libtpu: 0.0.40
codegen_flags: <defaults>
</compile_context>

<pallas_src>
import functools

import jax
import jax.numpy as jnp
from jax.experimental import pallas as pl
from jax.experimental.pallas import tpu as pltpu


# ----------------------------- Pallas kernel -------------------------------
def _double_conv_kernel(x_ref, w1_ref, b1_ref, w2_ref, b2_ref, o_ref, y1p_ref,
                        *, H, W, C_in, C_mid):
    """Fused conv3x3+BN+ReLU -> conv3x3+BN+ReLU for one batch element.

    x_ref  : (1, C_in, (H+3)*(W+2))  bf16  zero-padded, spatially flattened
    w1_ref : (C_mid, 9*C_in)         bf16  BN-folded weights, tap-major columns
    b1_ref : (C_mid, 1)              f32   BN-folded bias
    w2_ref : (C_out, 9*C_mid)        bf16
    b2_ref : (C_out, 1)              f32
    o_ref  : (1, C_out, H*(W+2))     f32   wide rows; junk cols sliced outside
    y1p_ref: (C_mid, (H+3)*(W+2))    f32   VMEM scratch: re-padded conv1 output
    """
    Wp = W + 2
    Lw = H * Wp   # wide-row output length (junk at columns W, W+1 of each row)

    def conv3x3(src, w_ref, b_ref, c_in):
        # src: (c_in, (H+3)*Wp); every tap is a contiguous lane-offset slice.
        w = w_ref[...]                                     # (c_out, 9*c_in) bf16
        acc = jnp.zeros((w.shape[0], Lw), jnp.float32)
        for dy in range(3):
            for dx in range(3):
                tap = dy * 3 + dx
                off = dy * Wp + dx
                acc = acc + jnp.dot(
                    w[:, tap * c_in:(tap + 1) * c_in],               # (c_out, c_in)
                    src[:, off:off + Lw].astype(jnp.bfloat16),       # (c_in, Lw)
                    preferred_element_type=jnp.float32)
        return jnp.maximum(acc + b_ref[...], 0.0)          # (c_out, Lw) f32

    # ---- conv1 + BN + ReLU -------------------------------------------------
    a1 = conv3x3(x_ref[0], w1_ref, b1_ref, C_in)           # (C_mid, Lw)

    # Zero the junk (wrapped) columns, then place into a zeroed VMEM buffer with
    # a 1-px halo for conv2: wide flat index j = y*Wp + x'  ->  (y+1)*Wp + (x'+1)
    lane = jax.lax.broadcasted_iota(jnp.int32, a1.shape, 1)
    a1 = jnp.where(lane % Wp < W, a1, 0.0)
    y1p_ref[...] = jnp.zeros_like(y1p_ref)                 # halo rows / cols / tail
    y1p_ref[:, Wp + 1:Wp + 1 + Lw] = a1

    # ---- conv2 + BN + ReLU -------------------------------------------------
    o_ref[0] = conv3x3(y1p_ref[...], w2_ref, b2_ref, C_mid)


# ----------------------------- JAX glue / wrapper ---------------------------
def _fold_bn_into_conv(w_oihw, conv_b, gamma, beta, mean, var, eps=1e-5):
    """Fold inference BatchNorm into the conv; lay weights out as (Cout, 9*Cin)."""
    scale = gamma / jnp.sqrt(var + eps)                          # (Cout,)
    w = w_oihw * scale[:, None, None, None]                      # (Cout,Cin,3,3)
    # tap-major columns: col index (dy*3+dx)*Cin + ci
    wm = jnp.transpose(w, (0, 2, 3, 1)).reshape(w.shape[0], -1)  # (Cout, 9*Cin)
    b = (conv_b - mean) * scale + beta                           # (Cout,)
    return wm.astype(jnp.bfloat16), b.reshape(-1, 1).astype(jnp.float32)


def inconv_forward(x_nchw, params, eps=1e-5):
    """Forward pass of `inconv` / `double_conv` (NCHW float32 in and out)."""
    N, C_in, H, W = x_nchw.shape
    Wp, Hp = W + 2, H + 3        # 1-px halo + 2 slack rows for the wide-row trick
    Lw, Lp = H * Wp, Hp * Wp

    w1, b1 = _fold_bn_into_conv(*params["conv1"], eps=eps)
    w2, b2 = _fold_bn_into_conv(*params["conv2"], eps=eps)
    C_mid, C_out = w1.shape[0], w2.shape[0]

    # zero-pad the halo, flatten (H,W) onto one lane axis, bf16 for the MXU.
    xp = jnp.pad(x_nchw, ((0, 0), (0, 0), (1, 2), (1, 1)))
    xpf = xp.reshape(N, C_in, Lp).astype(jnp.bfloat16)

    kernel = functools.partial(_double_conv_kernel, H=H, W=W,
                               C_in=C_in, C_mid=C_mid)
    flops = 2 * N * Lw * 9 * (C_in * C_mid + C_mid * C_out)
    bytes_accessed = (xpf.size * 2 + w1.size * 2 + w2.size * 2
                      + b1.size * 4 + b2.size * 4 + N * C_out * Lw * 4)

    out_wide = pl.pallas_call(
        kernel,
        out_shape=jax.ShapeDtypeStruct((N, C_out, Lw), jnp.float32),
        grid_spec=pltpu.PrefetchScalarGridSpec(
            num_scalar_prefetch=0,
            grid=(N,),
            in_specs=[
                pl.BlockSpec((1, C_in, Lp), lambda n: (n, 0, 0)),
                pl.BlockSpec((C_mid, 9 * C_in), lambda n: (0, 0)),
                pl.BlockSpec((C_mid, 1), lambda n: (0, 0)),
                pl.BlockSpec((C_out, 9 * C_mid), lambda n: (0, 0)),
                pl.BlockSpec((C_out, 1), lambda n: (0, 0)),
            ],
            out_specs=pl.BlockSpec((1, C_out, Lw), lambda n: (n, 0, 0)),
            scratch_shapes=[pltpu.VMEM((C_mid, Lp), jnp.float32)],
        ),
        compiler_params=pltpu.CompilerParams(
            dimension_semantics=("parallel",)),
        cost_estimate=pl.CostEstimate(flops=flops, transcendentals=0,
                                      bytes_accessed=bytes_accessed),
    )(xpf, w1, b1, w2, b2)

    # drop the 2 junk columns of each wide row -> (N, C_out, H, W), NCHW.
    return out_wide.reshape(N, C_out, H, Wp)[:, :, :, :W]


# ----------------------------- reference & params ---------------------------
def _reference_forward(x, params, eps=1e-5):
    """Pure-JAX f32 reference (inference-mode BN)."""
    def conv_bn_relu(x, p):
        w, b, gamma, beta, mean, var = p
        y = jax.lax.conv_general_dilated(
            x, w, window_strides=(1, 1), padding=((1, 1), (1, 1)),
            dimension_numbers=("NCHW", "OIHW", "NCHW"))
        y = y + b[None, :, None, None]
        y = (y - mean[None, :, None, None]) * (
            gamma / jnp.sqrt(var + eps))[None, :, None, None]
        y = y + beta[None, :, None, None]
        return jnp.maximum(y, 0.0)
    return conv_bn_relu(conv_bn_relu(x, params["conv1"]), params["conv2"])


def init_params(key, in_ch, out_ch):
    """Deterministic synthetic parameters matching double_conv(in_ch, out_ch)."""
    ks = jax.random.split(key, 8)

    def conv_bn(kw, kb, kg, kbn, cin, cout):
        w = jax.random.normal(kw, (cout, cin, 3, 3), jnp.float32) * 0.1
        b = jax.random.normal(kb, (cout,), jnp.float32) * 0.1
        gamma = 1.0 + 0.1 * jax.random.normal(kg, (cout,), jnp.float32)
        beta = 0.1 * jax.random.normal(kbn, (cout,), jnp.float32)
        mean = jnp.zeros((cout,), jnp.float32)
        var = jnp.ones((cout,), jnp.float32)
        return (w, b, gamma, beta, mean, var)

    return {
        "conv1": conv_bn(ks[0], ks[1], ks[2], ks[3], in_ch, out_ch),
        "conv2": conv_bn(ks[4], ks[5], ks[6], ks[7], out_ch, out_ch),
    }


if __name__ == "__main__":
    key = jax.random.PRNGKey(0)
    kx, kp = jax.random.split(key)

    in_ch, out_ch = 4, 8
    x = jax.random.normal(kx, (2, in_ch, 16, 16), jnp.float32)   # NCHW
    params = init_params(kp, in_ch, out_ch)

    out = jax.jit(inconv_forward)(x, params)
    jax.block_until_ready(out)
    assert out.shape == (2, out_ch, 16, 16), out.shape

    # loose tolerance: kernel uses bf16 matmul operands, reference is f32
    ref = _reference_forward(x, params)
    max_err = float(jnp.max(jnp.abs(out - ref)))
    assert max_err < 5e-2, f"max abs error vs reference: {max_err}"

    print("KERNEL_OK")
</pallas_src>

<mosaic_0001>
module attributes {stable_mosaic.version = 11 : i64} {
  func.func @_double_conv_kernel(%arg0: i32, %arg1: memref<1x4x342xbf16, #tpu.memory_space<vmem>>, %arg2: memref<8x36xbf16, #tpu.memory_space<vmem>>, %arg3: memref<8x1xf32, #tpu.memory_space<vmem>>, %arg4: memref<8x72xbf16, #tpu.memory_space<vmem>>, %arg5: memref<8x1xf32, #tpu.memory_space<vmem>>, %arg6: memref<1x8x288xf32, #tpu.memory_space<vmem>>, %arg7: memref<8x342xf32, #tpu.memory_space<vmem>>) attributes {dimension_semantics = [#tpu.dimension_semantics<parallel>], iteration_bounds = array<i64: 2>, scalar_prefetch = 0 : i64, scratch_operands = 1 : i64, tpu.core_type = #tpu.core_type<tc>, window_params = [{transform_indices = @transform_0, window_bounds = array<i64: 1, 4, 342>}, {pipeline_mode = #tpu.pipeline_mode<synchronous>, transform_indices = @transform_1, window_bounds = array<i64: 8, 36>}, {pipeline_mode = #tpu.pipeline_mode<synchronous>, transform_indices = @transform_2, window_bounds = array<i64: 8, 1>}, {pipeline_mode = #tpu.pipeline_mode<synchronous>, transform_indices = @transform_3, window_bounds = array<i64: 8, 72>}, {pipeline_mode = #tpu.pipeline_mode<synchronous>, transform_indices = @transform_4, window_bounds = array<i64: 8, 1>}, {transform_indices = @transform_5, window_bounds = array<i64: 1, 8, 288>}]} {
    %c0 = arith.constant 0 : index
    %c0_0 = arith.constant 0 : index
    %c0_1 = arith.constant 0 : index
    %0 = vector.load %arg1[%c0, %c0_0, %c0_1] : memref<1x4x342xbf16, #tpu.memory_space<vmem>>, vector<1x4x342xbf16>
    %1 = vector.shape_cast %0 : vector<1x4x342xbf16> to vector<4x342xbf16>
    %c0_2 = arith.constant 0 : index
    %c0_3 = arith.constant 0 : index
    %2 = vector.load %arg2[%c0_2, %c0_3] : memref<8x36xbf16, #tpu.memory_space<vmem>>, vector<8x36xbf16>
    %cst = arith.constant 0.000000e+00 : f32
    %3 = vector.broadcast %cst : f32 to vector<8x288xf32>
    %4 = vector.extract_strided_slice %2 {offsets = [0, 0], sizes = [8, 4], strides = [1, 1]} : vector<8x36xbf16> to vector<8x4xbf16>
    %5 = vector.extract_strided_slice %1 {offsets = [0, 0], sizes = [4, 288], strides = [1, 1]} : vector<4x342xbf16> to vector<4x288xbf16>
    %cst_4 = arith.constant dense<0.000000e+00> : vector<8x288xf32>
    %6 = tpu.matmul %4, %5, %cst_4 {dimension_numbers = #tpu.dot_dimension_numbers<[1], [0], [0], [1], [0, 0, 1, 1], [], []>} : vector<8x4xbf16>, vector<4x288xbf16>, vector<8x288xf32> -> vector<8x288xf32>
    %7 = arith.addf %3, %6 : vector<8x288xf32>
    %8 = vector.extract_strided_slice %2 {offsets = [0, 4], sizes = [8, 4], strides = [1, 1]} : vector<8x36xbf16> to vector<8x4xbf16>
    %9 = vector.extract_strided_slice %1 {offsets = [0, 1], sizes = [4, 288], strides = [1, 1]} : vector<4x342xbf16> to vector<4x288xbf16>
    %cst_5 = arith.constant dense<0.000000e+00> : vector<8x288xf32>
    %10 = tpu.matmul %8, %9, %cst_5 {dimension_numbers = #tpu.dot_dimension_numbers<[1], [0], [0], [1], [0, 0, 1, 1], [], []>} : vector<8x4xbf16>, vector<4x288xbf16>, vector<8x288xf32> -> vector<8x288xf32>
    %11 = arith.addf %7, %10 : vector<8x288xf32>
    %12 = vector.extract_strided_slice %2 {offsets = [0, 8], sizes = [8, 4], strides = [1, 1]} : vector<8x36xbf16> to vector<8x4xbf16>
    %13 = vector.extract_strided_slice %1 {offsets = [0, 2], sizes = [4, 288], strides = [1, 1]} : vector<4x342xbf16> to vector<4x288xbf16>
    %cst_6 = arith.constant dense<0.000000e+00> : vector<8x288xf32>
    %14 = tpu.matmul %12, %13, %cst_6 {dimension_numbers = #tpu.dot_dimension_numbers<[1], [0], [0], [1], [0, 0, 1, 1], [], []>} : vector<8x4xbf16>, vector<4x288xbf16>, vector<8x288xf32> -> vector<8x288xf32>
    %15 = arith.addf %11, %14 : vector<8x288xf32>
    %16 = vector.extract_strided_slice %2 {offsets = [0, 12], sizes = [8, 4], strides = [1, 1]} : vector<8x36xbf16> to vector<8x4xbf16>
    %17 = vector.extract_strided_slice %1 {offsets = [0, 18], sizes = [4, 288], strides = [1, 1]} : vector<4x342xbf16> to vector<4x288xbf16>
    %cst_7 = arith.constant dense<0.000000e+00> : vector<8x288xf32>
    %18 = tpu.matmul %16, %17, %cst_7 {dimension_numbers = #tpu.dot_dimension_numbers<[1], [0], [0], [1], [0, 0, 1, 1], [], []>} : vector<8x4xbf16>, vector<4x288xbf16>, vector<8x288xf32> -> vector<8x288xf32>
    %19 = arith.addf %15, %18 : vector<8x288xf32>
    %20 = vector.extract_strided_slice %2 {offsets = [0, 16], sizes = [8, 4], strides = [1, 1]} : vector<8x36xbf16> to vector<8x4xbf16>
    %21 = vector.extract_strided_slice %1 {offsets = [0, 19], sizes = [4, 288], strides = [1, 1]} : vector<4x342xbf16> to vector<4x288xbf16>
    %cst_8 = arith.constant dense<0.000000e+00> : vector<8x288xf32>
    %22 = tpu.matmul %20, %21, %cst_8 {dimension_numbers = #tpu.dot_dimension_numbers<[1], [0], [0], [1], [0, 0, 1, 1], [], []>} : vector<8x4xbf16>, vector<4x288xbf16>, vector<8x288xf32> -> vector<8x288xf32>
    %23 = arith.addf %19, %22 : vector<8x288xf32>
    %24 = vector.extract_strided_slice %2 {offsets = [0, 20], sizes = [8, 4], strides = [1, 1]} : vector<8x36xbf16> to vector<8x4xbf16>
    %25 = vector.extract_strided_slice %1 {offsets = [0, 20], sizes = [4, 288], strides = [1, 1]} : vector<4x342xbf16> to vector<4x288xbf16>
    %cst_9 = arith.constant dense<0.000000e+00> : vector<8x288xf32>
    %26 = tpu.matmul %24, %25, %cst_9 {dimension_numbers = #tpu.dot_dimension_numbers<[1], [0], [0], [1], [0, 0, 1, 1], [], []>} : vector<8x4xbf16>, vector<4x288xbf16>, vector<8x288xf32> -> vector<8x288xf32>
    %27 = arith.addf %23, %26 : vector<8x288xf32>
    %28 = vector.extract_strided_slice %2 {offsets = [0, 24], sizes = [8, 4], strides = [1, 1]} : vector<8x36xbf16> to vector<8x4xbf16>
    %29 = vector.extract_strided_slice %1 {offsets = [0, 36], sizes = [4, 288], strides = [1, 1]} : vector<4x342xbf16> to vector<4x288xbf16>
    %cst_10 = arith.constant dense<0.000000e+00> : vector<8x288xf32>
    %30 = tpu.matmul %28, %29, %cst_10 {dimension_numbers = #tpu.dot_dimension_numbers<[1], [0], [0], [1], [0, 0, 1, 1], [], []>} : vector<8x4xbf16>, vector<4x288xbf16>, vector<8x288xf32> -> vector<8x288xf32>
    %31 = arith.addf %27, %30 : vector<8x288xf32>
    %32 = vector.extract_strided_slice %2 {offsets = [0, 28], sizes = [8, 4], strides = [1, 1]} : vector<8x36xbf16> to vector<8x4xbf16>
    %33 = vector.extract_strided_slice %1 {offsets = [0, 37], sizes = [4, 288], strides = [1, 1]} : vector<4x342xbf16> to vector<4x288xbf16>
    %cst_11 = arith.constant dense<0.000000e+00> : vector<8x288xf32>
    %34 = tpu.matmul %32, %33, %cst_11 {dimension_numbers = #tpu.dot_dimension_numbers<[1], [0], [0], [1], [0, 0, 1, 1], [], []>} : vector<8x4xbf16>, vector<4x288xbf16>, vector<8x288xf32> -> vector<8x288xf32>
    %35 = arith.addf %31, %34 : vector<8x288xf32>
    %36 = vector.extract_strided_slice %2 {offsets = [0, 32], sizes = [8, 4], strides = [1, 1]} : vector<8x36xbf16> to vector<8x4xbf16>
    %37 = vector.extract_strided_slice %1 {offsets = [0, 38], sizes = [4, 288], strides = [1, 1]} : vector<4x342xbf16> to vector<4x288xbf16>
    %cst_12 = arith.constant dense<0.000000e+00> : vector<8x288xf32>
    %38 = tpu.matmul %36, %37, %cst_12 {dimension_numbers = #tpu.dot_dimension_numbers<[1], [0], [0], [1], [0, 0, 1, 1], [], []>} : vector<8x4xbf16>, vector<4x288xbf16>, vector<8x288xf32> -> vector<8x288xf32>
    %39 = arith.addf %35, %38 : vector<8x288xf32>
    %c0_13 = arith.constant 0 : index
    %c0_14 = arith.constant 0 : index
    %40 = vector.load %arg3[%c0_13, %c0_14] : memref<8x1xf32, #tpu.memory_space<vmem>>, vector<8x1xf32>
    %41 = vector.broadcast %40 : vector<8x1xf32> to vector<8x288xf32>
    %42 = arith.addf %39, %41 : vector<8x288xf32>
    %cst_15 = arith.constant 0.000000e+00 : f32
    %43 = vector.broadcast %cst_15 : f32 to vector<8x288xf32>
    %44 = arith.maximumf %42, %43 : vector<8x288xf32>
    %45 = tpu.iota {dimensions = array<i32: 1>} : vector<8x288xi32>
    %c18_i32 = arith.constant 18 : i32
    %c0_i32 = arith.constant 0 : i32
    %46 = arith.cmpi eq, %c18_i32, %c0_i32 : i32
    %c1_i32 = arith.constant 1 : i32
    %47 = arith.select %46, %c1_i32, %c18_i32 : i32
    %48 = vector.broadcast %47 : i32 to vector<8x288xi32>
    %49 = arith.remsi %45, %48 : vector<8x288xi32>
    %c0_i32_16 = arith.constant 0 : i32
    %50 = vector.broadcast %c0_i32_16 : i32 to vector<8x288xi32>
    %51 = arith.cmpi ne, %49, %50 : vector<8x288xi32>
    %c0_i32_17 = arith.constant 0 : i32
    %52 = vector.broadcast %c0_i32_17 : i32 to vector<8x288xi32>
    %53 = arith.cmpi slt, %49, %52 : vector<8x288xi32>
    %c0_i32_18 = arith.constant 0 : i32
    %54 = arith.cmpi slt, %47, %c0_i32_18 : i32
    %55 = vector.broadcast %54 : i1 to vector<8x288xi1>
    %56 = vector.broadcast %55 : vector<8x288xi1> to vector<8x288xi1>
    %57 = arith.xori %53, %56 : vector<8x288xi1>
    %58 = arith.andi %57, %51 : vector<8x288xi1>
    %59 = vector.broadcast %47 : i32 to vector<8x288xi32>
    %60 = arith.addi %49, %59 : vector<8x288xi32>
    %61 = arith.select %58, %60, %49 : vector<8x288xi1>, vector<8x288xi32>
    %c16_i32 = arith.constant 16 : i32
    %62 = vector.broadcast %c16_i32 : i32 to vector<8x288xi32>
    %63 = arith.cmpi slt, %61, %62 : vector<8x288xi32>
    %cst_19 = arith.constant 0.000000e+00 : f32
    %64 = vector.broadcast %cst_19 : f32 to vector<8x288xf32>
    %65 = arith.select %63, %44, %64 : vector<8x288xi1>, vector<8x288xf32>
    %cst_20 = arith.constant 0.000000e+00 : f32
    %66 = vector.broadcast %cst_20 : f32 to vector<8x342xf32>
    %c0_21 = arith.constant 0 : index
    %c0_22 = arith.constant 0 : index
    %67 = vector.load %arg7[%c0_21, %c0_22] : memref<8x342xf32, #tpu.memory_space<vmem>>, vector<8x342xf32>
    tpu.vector_store %arg7[%c0_21, %c0_22], %66 {strides = array<i32>} : memref<8x342xf32, #tpu.memory_space<vmem>>, vector<8x342xf32>,
    %c0_23 = arith.constant 0 : index
    %c19 = arith.constant 19 : index
    %68 = vector.load %arg7[%c0_23, %c19] : memref<8x342xf32, #tpu.memory_space<vmem>>, vector<8x288xf32>
    tpu.vector_store %arg7[%c0_23, %c19], %65 {strides = array<i32>} : memref<8x342xf32, #tpu.memory_space<vmem>>, vector<8x288xf32>,
    %c0_24 = arith.constant 0 : index
    %c0_25 = arith.constant 0 : index
    %69 = vector.load %arg7[%c0_24, %c0_25] : memref<8x342xf32, #tpu.memory_space<vmem>>, vector<8x342xf32>
    %c0_26 = arith.constant 0 : index
    %c0_27 = arith.constant 0 : index
    %70 = vector.load %arg4[%c0_26, %c0_27] : memref<8x72xbf16, #tpu.memory_space<vmem>>, vector<8x72xbf16>
    %cst_28 = arith.constant 0.000000e+00 : f32
    %71 = vector.broadcast %cst_28 : f32 to vector<8x288xf32>
    %72 = vector.extract_strided_slice %70 {offsets = [0, 0], sizes = [8, 8], strides = [1, 1]} : vector<8x72xbf16> to vector<8x8xbf16>
    %73 = vector.extract_strided_slice %69 {offsets = [0, 0], sizes = [8, 288], strides = [1, 1]} : vector<8x342xf32> to vector<8x288xf32>
    %74 = arith.truncf %73 : vector<8x288xf32> to vector<8x288xbf16>
    %cst_29 = arith.constant dense<0.000000e+00> : vector<8x288xf32>
    %75 = tpu.matmul %72, %74, %cst_29 {dimension_numbers = #tpu.dot_dimension_numbers<[1], [0], [0], [1], [0, 0, 1, 1], [], []>} : vector<8x8xbf16>, vector<8x288xbf16>, vector<8x288xf32> -> vector<8x288xf32>
    %76 = arith.addf %71, %75 : vector<8x288xf32>
    %77 = vector.extract_strided_slice %70 {offsets = [0, 8], sizes = [8, 8], strides = [1, 1]} : vector<8x72xbf16> to vector<8x8xbf16>
    %78 = vector.extract_strided_slice %69 {offsets = [0, 1], sizes = [8, 288], strides = [1, 1]} : vector<8x342xf32> to vector<8x288xf32>
    %79 = arith.truncf %78 : vector<8x288xf32> to vector<8x288xbf16>
    %cst_30 = arith.constant dense<0.000000e+00> : vector<8x288xf32>
    %80 = tpu.matmul %77, %79, %cst_30 {dimension_numbers = #tpu.dot_dimension_numbers<[1], [0], [0], [1], [0, 0, 1, 1], [], []>} : vector<8x8xbf16>, vector<8x288xbf16>, vector<8x288xf32> -> vector<8x288xf32>
    %81 = arith.addf %76, %80 : vector<8x288xf32>
    %82 = vector.extract_strided_slice %70 {offsets = [0, 16], sizes = [8, 8], strides = [1, 1]} : vector<8x72xbf16> to vector<8x8xbf16>
    %83 = vector.extract_strided_slice %69 {offsets = [0, 2], sizes = [8, 288], strides = [1, 1]} : vector<8x342xf32> to vector<8x288xf32>
    %84 = arith.truncf %83 : vector<8x288xf32> to vector<8x288xbf16>
    %cst_31 = arith.constant dense<0.000000e+00> : vector<8x288xf32>
    %85 = tpu.matmul %82, %84, %cst_31 {dimension_numbers = #tpu.dot_dimension_numbers<[1], [0], [0], [1], [0, 0, 1, 1], [], []>} : vector<8x8xbf16>, vector<8x288xbf16>, vector<8x288xf32> -> vector<8x288xf32>
    %86 = arith.addf %81, %85 : vector<8x288xf32>
    %87 = vector.extract_strided_slice %70 {offsets = [0, 24], sizes = [8, 8], strides = [1, 1]} : vector<8x72xbf16> to vector<8x8xbf16>
    %88 = vector.extract_strided_slice %69 {offsets = [0, 18], sizes = [8, 288], strides = [1, 1]} : vector<8x342xf32> to vector<8x288xf32>
    %89 = arith.truncf %88 : vector<8x288xf32> to vector<8x288xbf16>
    %cst_32 = arith.constant dense<0.000000e+00> : vector<8x288xf32>
    %90 = tpu.matmul %87, %89, %cst_32 {dimension_numbers = #tpu.dot_dimension_numbers<[1], [0], [0], [1], [0, 0, 1, 1], [], []>} : vector<8x8xbf16>, vector<8x288xbf16>, vector<8x288xf32> -> vector<8x288xf32>
    %91 = arith.addf %86, %90 : vector<8x288xf32>
    %92 = vector.extract_strided_slice %70 {offsets = [0, 32], sizes = [8, 8], strides = [1, 1]} : vector<8x72xbf16> to vector<8x8xbf16>
    %93 = vector.extract_strided_slice %69 {offsets = [0, 19], sizes = [8, 288], strides = [1, 1]} : vector<8x342xf32> to vector<8x288xf32>
    %94 = arith.truncf %93 : vector<8x288xf32> to vector<8x288xbf16>
    %cst_33 = arith.constant dense<0.000000e+00> : vector<8x288xf32>
    %95 = tpu.matmul %92, %94, %cst_33 {dimension_numbers = #tpu.dot_dimension_numbers<[1], [0], [0], [1], [0, 0, 1, 1], [], []>} : vector<8x8xbf16>, vector<8x288xbf16>, vector<8x288xf32> -> vector<8x288xf32>
    %96 = arith.addf %91, %95 : vector<8x288xf32>
    %97 = vector.extract_strided_slice %70 {offsets = [0, 40], sizes = [8, 8], strides = [1, 1]} : vector<8x72xbf16> to vector<8x8xbf16>
    %98 = vector.extract_strided_slice %69 {offsets = [0, 20], sizes = [8, 288], strides = [1, 1]} : vector<8x342xf32> to vector<8x288xf32>
    %99 = arith.truncf %98 : vector<8x288xf32> to vector<8x288xbf16>
    %cst_34 = arith.constant dense<0.000000e+00> : vector<8x288xf32>
    %100 = tpu.matmul %97, %99, %cst_34 {dimension_numbers = #tpu.dot_dimension_numbers<[1], [0], [0], [1], [0, 0, 1, 1], [], []>} : vector<8x8xbf16>, vector<8x288xbf16>, vector<8x288xf32> -> vector<8x288xf32>
    %101 = arith.addf %96, %100 : vector<8x288xf32>
    %102 = vector.extract_strided_slice %70 {offsets = [0, 48], sizes = [8, 8], strides = [1, 1]} : vector<8x72xbf16> to vector<8x8xbf16>
    %103 = vector.extract_strided_slice %69 {offsets = [0, 36], sizes = [8, 288], strides = [1, 1]} : vector<8x342xf32> to vector<8x288xf32>
    %104 = arith.truncf %103 : vector<8x288xf32> to vector<8x288xbf16>
    %cst_35 = arith.constant dense<0.000000e+00> : vector<8x288xf32>
    %105 = tpu.matmul %102, %104, %cst_35 {dimension_numbers = #tpu.dot_dimension_numbers<[1], [0], [0], [1], [0, 0, 1, 1], [], []>} : vector<8x8xbf16>, vector<8x288xbf16>, vector<8x288xf32> -> vector<8x288xf32>
    %106 = arith.addf %101, %105 : vector<8x288xf32>
    %107 = vector.extract_strided_slice %70 {offsets = [0, 56], sizes = [8, 8], strides = [1, 1]} : vector<8x72xbf16> to vector<8x8xbf16>
    %108 = vector.extract_strided_slice %69 {offsets = [0, 37], sizes = [8, 288], strides = [1, 1]} : vector<8x342xf32> to vector<8x288xf32>
    %109 = arith.truncf %108 : vector<8x288xf32> to vector<8x288xbf16>
    %cst_36 = arith.constant dense<0.000000e+00> : vector<8x288xf32>
    %110 = tpu.matmul %107, %109, %cst_36 {dimension_numbers = #tpu.dot_dimension_numbers<[1], [0], [0], [1], [0, 0, 1, 1], [], []>} : vector<8x8xbf16>, vector<8x288xbf16>, vector<8x288xf32> -> vector<8x288xf32>
    %111 = arith.addf %106, %110 : vector<8x288xf32>
    %112 = vector.extract_strided_slice %70 {offsets = [0, 64], sizes = [8, 8], strides = [1, 1]} : vector<8x72xbf16> to vector<8x8xbf16>
    %113 = vector.extract_strided_slice %69 {offsets = [0, 38], sizes = [8, 288], strides = [1, 1]} : vector<8x342xf32> to vector<8x288xf32>
    %114 = arith.truncf %113 : vector<8x288xf32> to vector<8x288xbf16>
    %cst_37 = arith.constant dense<0.000000e+00> : vector<8x288xf32>
    %115 = tpu.matmul %112, %114, %cst_37 {dimension_numbers = #tpu.dot_dimension_numbers<[1], [0], [0], [1], [0, 0, 1, 1], [], []>} : vector<8x8xbf16>, vector<8x288xbf16>, vector<8x288xf32> -> vector<8x288xf32>
    %116 = arith.addf %111, %115 : vector<8x288xf32>
    %c0_38 = arith.constant 0 : index
    %c0_39 = arith.constant 0 : index
    %117 = vector.load %arg5[%c0_38, %c0_39] : memref<8x1xf32, #tpu.memory_space<vmem>>, vector<8x1xf32>
    %118 = vector.broadcast %117 : vector<8x1xf32> to vector<8x288xf32>
    %119 = arith.addf %116, %118 : vector<8x288xf32>
    %cst_40 = arith.constant 0.000000e+00 : f32
    %120 = vector.broadcast %cst_40 : f32 to vector<8x288xf32>
    %121 = arith.maximumf %119, %120 : vector<8x288xf32>
    %c0_41 = arith.constant 0 : index
    %c0_42 = arith.constant 0 : index
    %c0_43 = arith.constant 0 : index
    %122 = vector.load %arg6[%c0_41, %c0_42, %c0_43] : memref<1x8x288xf32, #tpu.memory_space<vmem>>, vector<1x8x288xf32>
    %123 = vector.shape_cast %122 : vector<1x8x288xf32> to vector<8x288xf32>
    %124 = vector.shape_cast %121 : vector<8x288xf32> to vector<1x8x288xf32>
    tpu.vector_store %arg6[%c0_41, %c0_42, %c0_43], %124 {strides = array<i32>} : memref<1x8x288xf32, #tpu.memory_space<vmem>>, vector<1x8x288xf32>,
    return
  }
  func.func @transform_0(%arg0: i32) -> (i32, i32, i32) {
    %c0_i32 = arith.constant 0 : i32
    %c0_i32_0 = arith.constant 0 : i32
    %c0_i32_1 = arith.constant 0 : i32
    return %arg0, %c0_i32, %c0_i32_0 : i32, i32, i32
  }
  func.func @transform_1(%arg0: i32) -> (i32, i32) {
    %c0_i32 = arith.constant 0 : i32
    %c0_i32_0 = arith.constant 0 : i32
    %c0_i32_1 = arith.constant 0 : i32
    return %c0_i32, %c0_i32_0 : i32, i32
  }
  func.func @transform_2(%arg0: i32) -> (i32, i32) {
    %c0_i32 = arith.constant 0 : i32
    %c0_i32_0 = arith.constant 0 : i32
    %c0_i32_1 = arith.constant 0 : i32
    return %c0_i32, %c0_i32_0 : i32, i32
  }
  func.func @transform_3(%arg0: i32) -> (i32, i32) {
    %c0_i32 = arith.constant 0 : i32
    %c0_i32_0 = arith.constant 0 : i32
    %c0_i32_1 = arith.constant 0 : i32
    return %c0_i32, %c0_i32_0 : i32, i32
  }
  func.func @transform_4(%arg0: i32) -> (i32, i32) {
    %c0_i32 = arith.constant 0 : i32
    %c0_i32_0 = arith.constant 0 : i32
    %c0_i32_1 = arith.constant 0 : i32
    return %c0_i32, %c0_i32_0 : i32, i32
  }
  func.func @transform_5(%arg0: i32) -> (i32, i32, i32) {
    %c0_i32 = arith.constant 0 : i32
    %c0_i32_0 = arith.constant 0 : i32
    %c0_i32_1 = arith.constant 0 : i32
    return %arg0, %c0_i32, %c0_i32_0 : i32, i32, i32
  }
}

</mosaic_0001>

<llo_original>
// kernel: inconv_forward.1
$region0: #{inconv_forward.1}
  #allocation0 [shape = 'u32[]', space=smem, size = 0x4, offset = 0x4, fixed_abs, tag = 'smem constant byte address 0x4 - core index']
  #allocation1 [shape = 'u32[144,128]{1,0:T(1,128)}', space=vmem, size = 0x12000, scoped, tag = 'internal scratch']
  #allocation2 [shape = 'f32[8,342]{1,0:T(8,128)}', space=vmem, size = 0x3000, scoped, tag = 'scratch operand']
  %s0 = inlined_call_operand.vmem [shape: bf16[2,4,342], index: 0, kind: input, shape index: {}]
  %s1 = inlined_call_operand.vmem [shape: bf16[8,36], index: 1, kind: input, shape index: {}]
  %s2 = inlined_call_operand.vmem [shape: f32[8,1], index: 2, kind: input, shape index: {}]
  %s3 = inlined_call_operand.vmem [shape: bf16[8,72], index: 3, kind: input, shape index: {}]
  %s4 = inlined_call_operand.vmem [shape: f32[8,1], index: 4, kind: input, shape index: {}]
  %s5 = inlined_call_operand.vmem [shape: f32[2,8,288], index: 5, kind: output, shape index: {}]
  %s6 = sld [smem:[#allocation0]]
  $region53: #{inconv_forward.1} parent=0
    _
  %s8 = ssub.s32 1, %s6
  %s9 = scalar_select 0, %s8, %s6
  loop: start=0, step=1, limit=4
  $region2: #{inconv_forward.1} parent=0 // loop_pre_header
    _
  $region3: #{inconv_forward.1} parent=0 // loop_header
    %s11 = sphi 0, %s15
    %p12 = scmp.ge.s32.totalorder %s11, 4
    %s21 = sphi 0, %s23
    %s24 = sphi 0, %s21
    %s25 = sphi 0, %s24
    %s41 = sphi 0, %s25
    %s45 = sphi 0, %s45
    %s47 = sphi 0, %s45
    %s48 = sphi 0, %s47
    %s62 = sphi 0, %s48
    %s66 = sphi 0, %s66
    %s68 = sphi 0, %s66
    %s69 = sphi 0, %s68
    %s83 = sphi 0, %s69
    %s87 = sphi 0, %s87
    %s89 = sphi 0, %s87
    %s90 = sphi 0, %s89
    %s104 = sphi 0, %s90
    %s108 = sphi 0, %s108
    %s110 = sphi 0, %s108
    %s111 = sphi 0, %s110
    %s125 = sphi 0, %s111
    %s131 = sphi 0, %s133
    %s134 = sphi 0, %s131
    %s135 = sphi 0, %s134
    %s151 = sphi 0, %s135
  $region4: #{inconv_forward.1} parent=0 // loop_header_branch
    %14 = sbr.rel (%p12) target = $region8
  $region5: #{inconv_forward.1} parent=0 // loop_body
    %s16 = ssub.s32 %s11, 1
    %s17 = ssub.s32 %s11, 2
    %s18 = sadd.s32 %s11, 1
    %s19 = ssub.s32 %s11, %s18
    %p20 = scmp.eq.s32.totalorder %s19, 0
    %s22 = sadd.s32 %s21, 1
    %s23 = scalar_select %p20, %s21, %s22
    %p26 = pneg %p20
    %p27 = scmp.eq.s32.totalorder %s11, 1
    %p28 = por %p26, %p27
    %p29 = scmp.ne.s32.totalorder %s21, %s24
    %p30 = scmp.eq.s32.totalorder %s11, 0
    %p31 = por %p29, %p30
    %p32 = scmp.ne.s32.totalorder %s21, %s24
    %p33 = scmp.eq.s32.totalorder %s16, 1
    %p34 = por %p32, %p33
    %p35 = scmp.ne.s32.totalorder %s24, %s25
    %p36 = scmp.eq.s32.totalorder %s16, 0
    %p37 = por %p35, %p36
    %p38 = scmp.ne.s32.totalorder %s24, %s25
    %p39 = scmp.eq.s32.totalorder %s17, 1
    %p40 = por %p38, %p39
    %p42 = scmp.ne.s32.totalorder %s25, %s41
    %p43 = scmp.eq.s32.totalorder %s17, 0
    %p44 = por %p42, %p43
    %s46 = sadd.s32 %s45, 1
    %p49 = scmp.eq.s32.totalorder %s11, 1
    %p50 = scmp.ne.s32.totalorder %s45, %s47
    %p51 = scmp.eq.s32.totalorder %s11, 0
    %p52 = por %p50, %p51
    %p53 = scmp.ne.s32.totalorder %s45, %s47
    %p54 = scmp.eq.s32.totalorder %s16, 1
    %p55 = por %p53, %p54
    %p56 = scmp.ne.s32.totalorder %s47, %s48
    %p57 = scmp.eq.s32.totalorder %s16, 0
    %p58 = por %p56, %p57
    %p59 = scmp.ne.s32.totalorder %s47, %s48
    %p60 = scmp.eq.s32.totalorder %s17, 1
    %p61 = por %p59, %p60
    %p63 = scmp.ne.s32.totalorder %s48, %s62
    %p64 = scmp.eq.s32.totalorder %s17, 0
    %p65 = por %p63, %p64
    %s67 = sadd.s32 %s66, 1
    %p70 = scmp.eq.s32.totalorder %s11, 1
    %p71 = scmp.ne.s32.totalorder %s66, %s68
    %p72 = scmp.eq.s32.totalorder %s11, 0
    %p73 = por %p71, %p72
    %p74 = scmp.ne.s32.totalorder %s66, %s68
    %p75 = scmp.eq.s32.totalorder %s16, 1
    %p76 = por %p74, %p75
    %p77 = scmp.ne.s32.totalorder %s68, %s69
    %p78 = scmp.eq.s32.totalorder %s16, 0
    %p79 = por %p77, %p78
    %p80 = scmp.ne.s32.totalorder %s68, %s69
    %p81 = scmp.eq.s32.totalorder %s17, 1
    %p82 = por %p80, %p81
    %p84 = scmp.ne.s32.totalorder %s69, %s83
    %p85 = scmp.eq.s32.totalorder %s17, 0
    %p86 = por %p84, %p85
    %s88 = sadd.s32 %s87, 1
    %p91 = scmp.eq.s32.totalorder %s11, 1
    %p92 = scmp.ne.s32.totalorder %s87, %s89
    %p93 = scmp.eq.s32.totalorder %s11, 0
    %p94 = por %p92, %p93
    %p95 = scmp.ne.s32.totalorder %s87, %s89
    %p96 = scmp.eq.s32.totalorder %s16, 1
    %p97 = por %p95, %p96
    %p98 = scmp.ne.s32.totalorder %s89, %s90
    %p99 = scmp.eq.s32.totalorder %s16, 0
    %p100 = por %p98, %p99
    %p101 = scmp.ne.s32.totalorder %s89, %s90
    %p102 = scmp.eq.s32.totalorder %s17, 1
    %p103 = por %p101, %p102
    %p105 = scmp.ne.s32.totalorder %s90, %s104
    %p106 = scmp.eq.s32.totalorder %s17, 0
    %p107 = por %p105, %p106
    %s109 = sadd.s32 %s108, 1
    %p112 = scmp.eq.s32.totalorder %s11, 1
    %p113 = scmp.ne.s32.totalorder %s108, %s110
    %p114 = scmp.eq.s32.totalorder %s11, 0
    %p115 = por %p113, %p114
    %p116 = scmp.ne.s32.totalorder %s108, %s110
    %p117 = scmp.eq.s32.totalorder %s16, 1
    %p118 = por %p116, %p117
    %p119 = scmp.ne.s32.totalorder %s110, %s111
    %p120 = scmp.eq.s32.totalorder %s16, 0
    %p121 = por %p119, %p120
    %p122 = scmp.ne.s32.totalorder %s110, %s111
    %p123 = scmp.eq.s32.totalorder %s17, 1
    %p124 = por %p122, %p123
    %p126 = scmp.ne.s32.totalorder %s111, %s125
    %p127 = scmp.eq.s32.totalorder %s17, 0
    %p128 = por %p126, %p127
    %s129 = ssub.s32 %s11, %s18
    %p130 = scmp.eq.s32.totalorder %s129, 0
    %s132 = sadd.s32 %s131, 1
    %s133 = scalar_select %p130, %s131, %s132
    %p136 = pneg %p130
    %p137 = scmp.eq.s32.totalorder %s11, 1
    %p138 = por %p136, %p137
    %p139 = scmp.ne.s32.totalorder %s131, %s134
    %p140 = scmp.eq.s32.totalorder %s11, 0
    %p141 = por %p139, %p140
    %p142 = scmp.ne.s32.totalorder %s131, %s134
    %p143 = scmp.eq.s32.totalorder %s16, 1
    %p144 = por %p142, %p143
    %p145 = scmp.ne.s32.totalorder %s134, %s135
    %p146 = scmp.eq.s32.totalorder %s16, 0
    %p147 = por %p145, %p146
    %p148 = scmp.ne.s32.totalorder %s134, %s135
    %p149 = scmp.eq.s32.totalorder %s17, 1
    %p150 = por %p148, %p149
    %p152 = scmp.ne.s32.totalorder %s135, %s151
    %p153 = scmp.eq.s32.totalorder %s17, 0
    %p154 = por %p152, %p153
    %p155 = scmp.le.s32.totalorder 1, %s11
    %p156 = scmp.lt.s32.totalorder %s11, 3
    %p157 = pnand %p155, %p156
    %p158 = pneg %p157
    // Predicated region
    $region9: #{inconv_forward.1} parent=5 // pred_check
      _
    $region10: #{inconv_forward.1} parent=5 // pred_check_branch
      %160 = sbr.rel (%p157) target = $region12
    $region11: #{inconv_forward.1} parent=5 // pred_region
      %s161 = ssub.s32 %s11, 1
      // Predicated region
      $region13: #{inconv_forward.1} parent=11 // pred_check
        %p162 = pneg %p58
      $region14: #{inconv_forward.1} parent=11 // pred_check_branch
        %164 = sbr.rel (%p162) target = $region16
      $region15: #{inconv_forward.1} parent=11 // pred_region
        _
      $region16: #{inconv_forward.1} parent=11 // pred_fallthru
        _
      // Predicated region
      $region17: #{inconv_forward.1} parent=11 // pred_check
        %p165 = pneg %p79
      $region18: #{inconv_forward.1} parent=11 // pred_check_branch
        %167 = sbr.rel (%p165) target = $region20
      $region19: #{inconv_forward.1} parent=11 // pred_region
        _
      $region20: #{inconv_forward.1} parent=11 // pred_fallthru
        _
      // Predicated region
      $region21: #{inconv_forward.1} parent=11 // pred_check
        %p168 = pneg %p100
      $region22: #{inconv_forward.1} parent=11 // pred_check_branch
        %170 = sbr.rel (%p168) target = $region24
      $region23: #{inconv_forward.1} parent=11 // pred_region
        _
      $region24: #{inconv_forward.1} parent=11 // pred_fallthru
        _
      // Predicated region
      $region25: #{inconv_forward.1} parent=11 // pred_check
        %p171 = pneg %p121
      $region26: #{inconv_forward.1} parent=11 // pred_check_branch
        %173 = sbr.rel (%p171) target = $region28
      $region27: #{inconv_forward.1} parent=11 // pred_region
        _
      $region28: #{inconv_forward.1} parent=11 // pred_fallthru
        _
    $region12: #{inconv_forward.1} parent=5 // pred_fallthru
      _
    %p174 = scmp.lt.s32.totalorder %s11, 2
    // Predicated region
    $region29: #{inconv_forward.1} parent=5 // pred_check
      %p175 = pneg %p174
    $region30: #{inconv_forward.1} parent=5 // pred_check_branch
      %177 = sbr.rel (%p175) target = $region32
    $region31: #{inconv_forward.1} parent=5 // pred_region
      // Predicated region
      $region33: #{inconv_forward.1} parent=31 // pred_check
        %p178 = pneg %p31
      $region34: #{inconv_forward.1} parent=31 // pred_check_branch
        %180 = sbr.rel (%p178) target = $region36
      $region35: #{inconv_forward.1} parent=31 // pred_region
        %p181 = scmp.lt.s32.totalorder %s11, 1
        %s182 = scalar_select %p181, %s11, 1
        %s183 = smul.addr %s182, 3
        %s184 = smul.addr %s183, 2
        %s185 = scalar_lea.vmem %s0, %s184
      $region36: #{inconv_forward.1} parent=31 // pred_fallthru
        _
    $region32: #{inconv_forward.1} parent=5 // pred_fallthru
      _
    %p186 = scmp.le.s32.totalorder 1, %s11
    %p187 = scmp.lt.s32.totalorder %s11, 3
    %p188 = pnand %p186, %p187
    %p189 = pneg %p188
    // Predicated region
    $region37: #{inconv_forward.1} parent=5 // pred_check
      _
    $region38: #{inconv_forward.1} parent=5 // pred_check_branch
      %191 = sbr.rel (%p188) target = $region40
    $region39: #{inconv_forward.1} parent=5 // pred_region
      %s192 = ssub.s32 %s11, 1
      %p193 = scmp.lt.s32.totalorder %s16, 1
      %s194 = scalar_select %p193, %s16, 1
      %s195 = smul.addr %s194, 3
      %s196 = smul.addr %s195, 2
      %s197 = scalar_lea.vmem %s0, %s196
      %p198 = pneg %p37
      %p199 = pneg %p34
      %p200 = pneg %p58
      %p201 = pneg %p55
      %p202 = pneg %p79
      %p203 = pneg %p76
      %p204 = pneg %p100
      %p205 = pneg %p97
      %p206 = pneg %p121
      %p207 = pneg %p118
      %p208 = pneg %p147
      %p209 = pneg %p144
      %p210 = scmp.lt.s32.totalorder %s16, 1
      %s211 = scalar_select %p210, %s16, 1
      %s212 = smul.addr %s211, 3
      %s213 = smul.addr %s212, 8
      %s214 = scalar_lea.vmem %s5, %s213
      %p215 = scmp.lt.s32.totalorder %s16, 1
      %s216 = scalar_select %p215, %s16, 1
      %s217 = smul.addr %s216, 3
      %s218 = smul.addr %s217, 2
      %s219 = scalar_lea.vmem %s0, %s218
      %p220 = scmp.lt.s32.totalorder %s16, 1
      %s221 = scalar_select %p220, %s16, 1
      %s222 = smul.addr %s221, 3
      %s223 = smul.addr %s222, 8
      %s224 = scalar_lea.vmem %s5, %s223
      %v226 = vld [vmem:[%s219] sm:$0x3f]
      %v227 = vld [vmem:[%s1] sm:$0xf]
      %v229 = vunpack.c.l.b16 %v227
      %v230 = vpack.c.b16 %v229, %v229
      %231 = vrot.lane.b32.xlu0 %v230, 124
      %v232 = vpop.permute.xlu0 %231
      %v234 = vcombine.high %v226, %v226
      %v236 = vunpack.c.l.s4 1983009808
      %v237 = vunpack.c.0.s8 %v236
      %v238 = vlaneseq
      %v239 = vshrl.u32 %v238, 7
      %v240 = vsub.s32 %v237, %v239
      %v241 = vrot.slane %v226, %v240
      %v243 = vunpack.c.l.s4 1983009808
      %v244 = vunpack.c.0.s8 %v243
      %v245 = vlaneseq
      %v246 = vshrl.u32 %v245, 7
      %v247 = vsub.s32 %v244, %v246
      %v248 = vrot.slane %v234, %v247
      %v249 = vcombine.high %v241, %v241
      %250 = vrot.lane.b32.xlu0 %v241, 127
      %v251 = vpop.permute.xlu0 %250
      %252 = vrot.lane.b32.xlu0 %v249, 127
      %v253 = vpop.permute.xlu0 %252
      %254 = vrot.lane.b32.xlu0 %v248, 127
      %v255 = vpop.permute.xlu0 %254
      %vm256 = vcmask 1039360
      %v257 = vsel %vm256, %v251, %v253
      %v258 = vsel %vm256, %v253, %v255
      %vm259 = vcmask 31744
      %v261 = vsel %vm259, %v232, 0
      %vm263 = vcmask 1041408
      %v265 = vsel %vm263, %v257, 0
      %v268 = vsel %vm263, %v258, 0
      %v271 = vsel %vm263, %v255, 0
      %273 = vmatprep.subr.bf16.mxu0 %v268
      %274 = vmatpush1.bf16.msra.mxu0 %v265
      %275 = vmatprep.subr.bf16.mxu0 0
      %276 = vmatpush1.bf16.msra.mxu0 0
      %277 = vmatprep.subr.bf16.mxu0 0
      %278 = vmatpush1.bf16.msra.mxu0 0
      %279 = vmatprep.subr.bf16.mxu0 0
      %280 = vmatpush1.bf16.msra.mxu0 0
      %281 = vmatprep.subr.bf16.mxu0 0
      %282 = vmatpush1.bf16.msra.mxu0 0
      %283 = vmatprep.subr.bf16.mxu0 0
      %284 = vmatpush1.bf16.msra.mxu0 0
      %285 = vmatprep.subr.bf16.mxu0 0
      %286 = vmatpush1.bf16.msra.mxu0 0
      %287 = vmatprep.subr.bf16.mxu0 0
      %288 = vmatpush1.bf16.msra.mxu0 0
      %289 = vmatprep.subr.bf16.mxu0 0
      %290 = vmatpush1.bf16.msra.mxu0 0
      %291 = vmatprep.subr.bf16.mxu0 0
      %292 = vmatpush1.bf16.msra.mxu0 0
      %293 = vmatprep.subr.bf16.mxu0 0
      %294 = vmatpush1.bf16.msra.mxu0 0
      %295 = vmatprep.subr.bf16.mxu0 0
      %296 = vmatpush1.bf16.msra.mxu0 0
      %297 = vmatprep.subr.bf16.mxu0 0
      %298 = vmatpush1.bf16.msra.mxu0 0
      %299 = vmatprep.subr.bf16.mxu0 0
      %300 = vmatpush1.bf16.msra.mxu0 0
      %301 = vmatprep.subr.bf16.mxu0 0
      %302 = vmatpush1.bf16.msra.mxu0 0
      %303 = vmatprep.subr.bf16.mxu0 0
      %304 = vmatpush1.bf16.msra.mxu0 0
      %305 = vmatprep.mubr.bf16.mxu0 0
      %306 = vmatmul.mubr.bf16.gmra.mrb[0].mxu0 %v261
      %v307 = vpop.f32.mrb[0].mxu0
      %v308 = vadd.f32 0.0, %v307
      %v309 = vpop.f32.mrb[0].mxu0
      %v310 = vadd.f32 0.0, %v309
      %v311 = vpop.f32.mrb[0].mxu0
      %v312 = vpop.f32.mrb[0].mxu0
      %313 = vdwg.mxu0
      %314 = vmatprep.subr.bf16.mxu0 0
      %315 = vmatpush1.bf16.msra.mxu0 %v271
      %316 = vmatprep.subr.bf16.mxu0 0
      %317 = vmatpush1.bf16.msra.mxu0 0
      %318 = vmatprep.subr.bf16.mxu0 0
      %319 = vmatpush1.bf16.msra.mxu0 0
      %320 = vmatprep.subr.bf16.mxu0 0
      %321 = vmatpush1.bf16.msra.mxu0 0
      %322 = vmatprep.subr.bf16.mxu0 0
      %323 = vmatpush1.bf16.msra.mxu0 0
      %324 = vmatprep.subr.bf16.mxu0 0
      %325 = vmatpush1.bf16.msra.mxu0 0
      %326 = vmatprep.subr.bf16.mxu0 0
      %327 = vmatpush1.bf16.msra.mxu0 0
      %328 = vmatprep.subr.bf16.mxu0 0
      %329 = vmatpush1.bf16.msra.mxu0 0
      %330 = vmatprep.subr.bf16.mxu0 0
      %331 = vmatpush1.bf16.msra.mxu0 0
      %332 = vmatprep.subr.bf16.mxu0 0
      %333 = vmatpush1.bf16.msra.mxu0 0
      %334 = vmatprep.subr.bf16.mxu0 0
      %335 = vmatpush1.bf16.msra.mxu0 0
      %336 = vmatprep.subr.bf16.mxu0 0
      %337 = vmatpush1.bf16.msra.mxu0 0
      %338 = vmatprep.subr.bf16.mxu0 0
      %339 = vmatpush1.bf16.msra.mxu0 0
      %340 = vmatprep.subr.bf16.mxu0 0
      %341 = vmatpush1.bf16.msra.mxu0 0
      %342 = vmatprep.subr.bf16.mxu0 0
      %343 = vmatpush1.bf16.msra.mxu0 0
      %344 = vmatprep.subr.bf16.mxu0 0
      %345 = vmatpush1.bf16.msra.mxu0 0
      %346 = vmatprep.mubr.bf16.mxu0 0
      %347 = vmatmul.mubr.bf16.gmra.mrb[0].mxu0 %v261
      %v348 = vpop.f32.mrb[0].mxu0
      %v349 = vadd.f32 0.0, %v348
      %v350 = vpop.f32.mrb[0].mxu0
      %v351 = vpop.f32.mrb[0].mxu0
      %v352 = vpop.f32.mrb[0].mxu0
      %353 = vdwg.mxu0
      %v355 = vsel %vm259, %v227, 0
      %v358 = vsel %vm263, %v241, 0
      %v361 = vsel %vm263, %v249, 0
      %v364 = vsel %vm263, %v248, 0
      %366 = vmatprep.subr.bf16.mxu0 %v361
      %367 = vmatpush1.bf16.msra.mxu0 %v358
      %368 = vmatprep.subr.bf16.mxu0 0
      %369 = vmatpush1.bf16.msra.mxu0 0
      %370 = vmatprep.subr.bf16.mxu0 0
      %371 = vmatpush1.bf16.msra.mxu0 0
      %372 = vmatprep.subr.bf16.mxu0 0
      %373 = vmatpush1.bf16.msra.mxu0 0
      %374 = vmatprep.subr.bf16.mxu0 0
      %375 = vmatpush1.bf16.msra.mxu0 0
      %376 = vmatprep.subr.bf16.mxu0 0
      %377 = vmatpush1.bf16.msra.mxu0 0
      %378 = vmatprep.subr.bf16.mxu0 0
      %379 = vmatpush1.bf16.msra.mxu0 0
      %380 = vmatprep.subr.bf16.mxu0 0
      %381 = vmatpush1.bf16.msra.mxu0 0
      %382 = vmatprep.subr.bf16.mxu0 0
      %383 = vmatpush1.bf16.msra.mxu0 0
      %384 = vmatprep.subr.bf16.mxu0 0
      %385 = vmatpush1.bf16.msra.mxu0 0
      %386 = vmatprep.subr.bf16.mxu0 0
      %387 = vmatpush1.bf16.msra.mxu0 0
      %388 = vmatprep.subr.bf16.mxu0 0
      %389 = vmatpush1.bf16.msra.mxu0 0
      %390 = vmatprep.subr.bf16.mxu0 0
      %391 = vmatpush1.bf16.msra.mxu0 0
      %392 = vmatprep.subr.bf16.mxu0 0
      %393 = vmatpush1.bf16.msra.mxu0 0
      %394 = vmatprep.subr.bf16.mxu0 0
      %395 = vmatpush1.bf16.msra.mxu0 0
      %396 = vmatprep.subr.bf16.mxu0 0
      %397 = vmatpush1.bf16.msra.mxu0 0
      %398 = vmatprep.mubr.bf16.mxu0 0
      %399 = vmatmul.mubr.bf16.gmra.mrb[0].mxu0 %v355
      %v400 = vpop.f32.mrb[0].mxu0
      %v401 = vadd.f32 %v308, %v400
      %v402 = vpop.f32.mrb[0].mxu0
      %v403 = vadd.f32 %v310, %v402
      %v404 = vpop.f32.mrb[0].mxu0
      %v405 = vpop.f32.mrb[0].mxu0
      %406 = vdwg.mxu0
      %407 = vmatprep.subr.bf16.mxu0 0
      %408 = vmatpush1.bf16.msra.mxu0 %v364
      %409 = vmatprep.subr.bf16.mxu0 0
      %410 = vmatpush1.bf16.msra.mxu0 0
      %411 = vmatprep.subr.bf16.mxu0 0
      %412 = vmatpush1.bf16.msra.mxu0 0
      %413 = vmatprep.subr.bf16.mxu0 0
      %414 = vmatpush1.bf16.msra.mxu0 0
      %415 = vmatprep.subr.bf16.mxu0 0
      %416 = vmatpush1.bf16.msra.mxu0 0
      %417 = vmatprep.subr.bf16.mxu0 0
      %418 = vmatpush1.bf16.msra.mxu0 0
      %419 = vmatprep.subr.bf16.mxu0 0
      %420 = vmatpush1.bf16.msra.mxu0 0
      %421 = vmatprep.subr.bf16.mxu0 0
      %422 = vmatpush1.bf16.msra.mxu0 0
      %423 = vmatprep.subr.bf16.mxu0 0
      %424 = vmatpush1.bf16.msra.mxu0 0
      %425 = vmatprep.subr.bf16.mxu0 0
      %426 = vmatpush1.bf16.msra.mxu0 0
      %427 = vmatprep.subr.bf16.mxu0 0
      %428 = vmatpush1.bf16.msra.mxu0 0
      %429 = vmatprep.subr.bf16.mxu0 0
      %430 = vmatpush1.bf16.msra.mxu0 0
      %431 = vmatprep.subr.bf16.mxu0 0
      %432 = vmatpush1.bf16.msra.mxu0 0
      %433 = vmatprep.subr.bf16.mxu0 0
      %434 = vmatpush1.bf16.msra.mxu0 0
      %435 = vmatprep.subr.bf16.mxu0 0
      %436 = vmatpush1.bf16.msra.mxu0 0
      %437 = vmatprep.subr.bf16.mxu0 0
      %438 = vmatpush1.bf16.msra.mxu0 0
      %439 = vmatprep.mubr.bf16.mxu0 0
      %440 = vmatmul.mubr.bf16.gmra.mrb[0].mxu0 %v355
      %v441 = vpop.f32.mrb[0].mxu0
      %v442 = vadd.f32 %v349, %v441
      %v443 = vpop.f32.mrb[0].mxu0
      %v444 = vpop.f32.mrb[0].mxu0
      %v445 = vpop.f32.mrb[0].mxu0
      %446 = vdwg.mxu0
      %447 = vrot.lane.b32.xlu0 %v230, 120
      %v448 = vpop.permute.xlu0 %447
      %449 = vrot.lane.b32.xlu0 %v241, 126
      %v450 = vpop.permute.xlu0 %449
      %451 = vrot.lane.b32.xlu0 %v249, 126
      %v452 = vpop.permute.xlu0 %451
      %453 = vrot.lane.b32.xlu0 %v248, 126
      %v454 = vpop.permute.xlu0 %453
      %vm455 = vcmask 1031168
      %v456 = vsel %vm455, %v450, %v452
      %v457 = vsel %vm455, %v452, %v454
      %v459 = vsel %vm259, %v448, 0
      %v462 = vsel %vm263, %v456, 0
      %v465 = vsel %vm263, %v457, 0
      %v468 = vsel %vm263, %v454, 0
      %470 = vmatprep.subr.bf16.mxu0 %v465
      %471 = vmatpush1.bf16.msra.mxu0 %v462
      %472 = vmatprep.subr.bf16.mxu0 0
      %473 = vmatpush1.bf16.msra.mxu0 0
      %474 = vmatprep.subr.bf16.mxu0 0
      %475 = vmatpush1.bf16.msra.mxu0 0
      %476 = vmatprep.subr.bf16.mxu0 0
      %477 = vmatpush1.bf16.msra.mxu0 0
      %478 = vmatprep.subr.bf16.mxu0 0
      %479 = vmatpush1.bf16.msra.mxu0 0
      %480 = vmatprep.subr.bf16.mxu0 0
      %481 = vmatpush1.bf16.msra.mxu0 0
      %482 = vmatprep.subr.bf16.mxu0 0
      %483 = vmatpush1.bf16.msra.mxu0 0
      %484 = vmatprep.subr.bf16.mxu0 0
      %485 = vmatpush1.bf16.msra.mxu0 0
      %486 = vmatprep.subr.bf16.mxu0 0
      %487 = vmatpush1.bf16.msra.mxu0 0
      %488 = vmatprep.subr.bf16.mxu0 0
      %489 = vmatpush1.bf16.msra.mxu0 0
      %490 = vmatprep.subr.bf16.mxu0 0
      %491 = vmatpush1.bf16.msra.mxu0 0
      %492 = vmatprep.subr.bf16.mxu0 0
      %493 = vmatpush1.bf16.msra.mxu0 0
      %494 = vmatprep.subr.bf16.mxu0 0
      %495 = vmatpush1.bf16.msra.mxu0 0
      %496 = vmatprep.subr.bf16.mxu0 0
      %497 = vmatpush1.bf16.msra.mxu0 0
      %498 = vmatprep.subr.bf16.mxu0 0
      %499 = vmatpush1.bf16.msra.mxu0 0
      %500 = vmatprep.subr.bf16.mxu0 0
      %501 = vmatpush1.bf16.msra.mxu0 0
      %502 = vmatprep.mubr.bf16.mxu0 0
      %503 = vmatmul.mubr.bf16.gmra.mrb[0].mxu0 %v459
      %v504 = vpop.f32.mrb[0].mxu0
      %v505 = vadd.f32 0.0, %v504
      %v506 = vpop.f32.mrb[0].mxu0
      %v507 = vadd.f32 0.0, %v506
      %v508 = vpop.f32.mrb[0].mxu0
      %v509 = vpop.f32.mrb[0].mxu0
      %510 = vdwg.mxu0
      %511 = vmatprep.subr.bf16.mxu0 0
      %512 = vmatpush1.bf16.msra.mxu0 %v468
      %513 = vmatprep.subr.bf16.mxu0 0
      %514 = vmatpush1.bf16.msra.mxu0 0
      %515 = vmatprep.subr.bf16.mxu0 0
      %516 = vmatpush1.bf16.msra.mxu0 0
      %517 = vmatprep.subr.bf16.mxu0 0
      %518 = vmatpush1.bf16.msra.mxu0 0
      %519 = vmatprep.subr.bf16.mxu0 0
      %520 = vmatpush1.bf16.msra.mxu0 0
      %521 = vmatprep.subr.bf16.mxu0 0
      %522 = vmatpush1.bf16.msra.mxu0 0
      %523 = vmatprep.subr.bf16.mxu0 0
      %524 = vmatpush1.bf16.msra.mxu0 0
      %525 = vmatprep.subr.bf16.mxu0 0
      %526 = vmatpush1.bf16.msra.mxu0 0
      %527 = vmatprep.subr.bf16.mxu0 0
      %528 = vmatpush1.bf16.msra.mxu0 0
      %529 = vmatprep.subr.bf16.mxu0 0
      %530 = vmatpush1.bf16.msra.mxu0 0
      %531 = vmatprep.subr.bf16.mxu0 0
      %532 = vmatpush1.bf16.msra.mxu0 0
      %533 = vmatprep.subr.bf16.mxu0 0
      %534 = vmatpush1.bf16.msra.mxu0 0
      %535 = vmatprep.subr.bf16.mxu0 0
      %536 = vmatpush1.bf16.msra.mxu0 0
      %537 = vmatprep.subr.bf16.mxu0 0
      %538 = vmatpush1.bf16.msra.mxu0 0
      %539 = vmatprep.subr.bf16.mxu0 0
      %540 = vmatpush1.bf16.msra.mxu0 0
      %541 = vmatprep.subr.bf16.mxu0 0
      %542 = vmatpush1.bf16.msra.mxu0 0
      %543 = vmatprep.mubr.bf16.mxu0 0
      %544 = vmatmul.mubr.bf16.gmra.mrb[0].mxu0 %v459
      %v545 = vpop.f32.mrb[0].mxu0
      %v546 = vadd.f32 0.0, %v545
      %v547 = vpop.f32.mrb[0].mxu0
      %v548 = vpop.f32.mrb[0].mxu0
      %v549 = vpop.f32.mrb[0].mxu0
      %550 = vdwg.mxu0
      %v551 = vadd.f32 %v401, %v505
      %v552 = vadd.f32 %v403, %v507
      %v553 = vadd.f32 %v442, %v546
      %554 = vrot.lane.b32.xlu0 %v230, 116
      %v555 = vpop.permute.xlu0 %554
      %556 = vrot.lane.b32.xlu0 %v241, 110
      %v557 = vpop.permute.xlu0 %556
      %558 = vrot.lane.b32.xlu0 %v249, 110
      %v559 = vpop.permute.xlu0 %558
      %560 = vrot.lane.b32.xlu0 %v248, 110
      %v561 = vpop.permute.xlu0 %560
      %vm562 = vcmask 900096
      %v563 = vsel %vm562, %v557, %v559
      %v564 = vsel %vm562, %v559, %v561
      %v566 = vsel %vm259, %v555, 0
      %v569 = vsel %vm263, %v563, 0
      %v572 = vsel %vm263, %v564, 0
      %v575 = vsel %vm263, %v561, 0
      %577 = vmatprep.subr.bf16.mxu0 %v572
      %578 = vmatpush1.bf16.msra.mxu0 %v569
      %579 = vmatprep.subr.bf16.mxu0 0
      %580 = vmatpush1.bf16.msra.mxu0 0
      %581 = vmatprep.subr.bf16.mxu0 0
      %582 = vmatpush1.bf16.msra.mxu0 0
      %583 = vmatprep.subr.bf16.mxu0 0
      %584 = vmatpush1.bf16.msra.mxu0 0
      %585 = vmatprep.subr.bf16.mxu0 0
      %586 = vmatpush1.bf16.msra.mxu0 0
      %587 = vmatprep.subr.bf16.mxu0 0
      %588 = vmatpush1.bf16.msra.mxu0 0
      %589 = vmatprep.subr.bf16.mxu0 0
      %590 = vmatpush1.bf16.msra.mxu0 0
      %591 = vmatprep.subr.bf16.mxu0 0
      %592 = vmatpush1.bf16.msra.mxu0 0
      %593 = vmatprep.subr.bf16.mxu0 0
      %594 = vmatpush1.bf16.msra.mxu0 0
      %595 = vmatprep.subr.bf16.mxu0 0
      %596 = vmatpush1.bf16.msra.mxu0 0
      %597 = vmatprep.subr.bf16.mxu0 0
      %598 = vmatpush1.bf16.msra.mxu0 0
      %599 = vmatprep.subr.bf16.mxu0 0
      %600 = vmatpush1.bf16.msra.mxu0 0
      %601 = vmatprep.subr.bf16.mxu0 0
      %602 = vmatpush1.bf16.msra.mxu0 0
      %603 = vmatprep.subr.bf16.mxu0 0
      %604 = vmatpush1.bf16.msra.mxu0 0
      %605 = vmatprep.subr.bf16.mxu0 0
      %606 = vmatpush1.bf16.msra.mxu0 0
      %607 = vmatprep.subr.bf16.mxu0 0
      %608 = vmatpush1.bf16.msra.mxu0 0
      %609 = vmatprep.mubr.bf16.mxu0 0
      %610 = vmatmul.mubr.bf16.gmra.mrb[0].mxu0 %v566
      %v611 = vpop.f32.mrb[0].mxu0
      %v612 = vadd.f32 0.0, %v611
      %v613 = vpop.f32.mrb[0].mxu0
      %v614 = vadd.f32 0.0, %v613
      %v615 = vpop.f32.mrb[0].mxu0
      %v616 = vpop.f32.mrb[0].mxu0
      %617 = vdwg.mxu0
      %618 = vmatprep.subr.bf16.mxu0 0
      %619 = vmatpush1.bf16.msra.mxu0 %v575
      %620 = vmatprep.subr.bf16.mxu0 0
      %621 = vmatpush1.bf16.msra.mxu0 0
      %622 = vmatprep.subr.bf16.mxu0 0
      %623 = vmatpush1.bf16.msra.mxu0 0
      %624 = vmatprep.subr.bf16.mxu0 0
      %625 = vmatpush1.bf16.msra.mxu0 0
      %626 = vmatprep.subr.bf16.mxu0 0
      %627 = vmatpush1.bf16.msra.mxu0 0
      %628 = vmatprep.subr.bf16.mxu0 0
      %629 = vmatpush1.bf16.msra.mxu0 0
      %630 = vmatprep.subr.bf16.mxu0 0
      %631 = vmatpush1.bf16.msra.mxu0 0
      %632 = vmatprep.subr.bf16.mxu0 0
      %633 = vmatpush1.bf16.msra.mxu0 0
      %634 = vmatprep.subr.bf16.mxu0 0
      %635 = vmatpush1.bf16.msra.mxu0 0
      %636 = vmatprep.subr.bf16.mxu0 0
      %637 = vmatpush1.bf16.msra.mxu0 0
      %638 = vmatprep.subr.bf16.mxu0 0
      %639 = vmatpush1.bf16.msra.mxu0 0
      %640 = vmatprep.subr.bf16.mxu0 0
      %641 = vmatpush1.bf16.msra.mxu0 0
      %642 = vmatprep.subr.bf16.mxu0 0
      %643 = vmatpush1.bf16.msra.mxu0 0
      %644 = vmatprep.subr.bf16.mxu0 0
      %645 = vmatpush1.bf16.msra.mxu0 0
      %646 = vmatprep.subr.bf16.mxu0 0
      %647 = vmatpush1.bf16.msra.mxu0 0
      %648 = vmatprep.subr.bf16.mxu0 0
      %649 = vmatpush1.bf16.msra.mxu0 0
      %650 = vmatprep.mubr.bf16.mxu0 0
      %651 = vmatmul.mubr.bf16.gmra.mrb[0].mxu0 %v566
      %v652 = vpop.f32.mrb[0].mxu0
      %v653 = vadd.f32 0.0, %v652
      %v654 = vpop.f32.mrb[0].mxu0
      %v655 = vpop.f32.mrb[0].mxu0
      %v656 = vpop.f32.mrb[0].mxu0
      %657 = vdwg.mxu0
      %v658 = vadd.f32 %v551, %v612
      %v659 = vadd.f32 %v552, %v614
      %v660 = vadd.f32 %v553, %v653
      %661 = vrot.lane.b32.xlu0 %v230, 112
      %v662 = vpop.permute.xlu0 %661
      %663 = vrot.lane.b32.xlu0 %v241, 109
      %v664 = vpop.permute.xlu0 %663
      %665 = vrot.lane.b32.xlu0 %v249, 109
      %v666 = vpop.permute.xlu0 %665
      %667 = vrot.lane.b32.xlu0 %v248, 109
      %v668 = vpop.permute.xlu0 %667
      %vm669 = vcmask 891904
      %v670 = vsel %vm669, %v664, %v666
      %v671 = vsel %vm669, %v666, %v668
      %v673 = vsel %vm259, %v662, 0
      %v676 = vsel %vm263, %v670, 0
      %v679 = vsel %vm263, %v671, 0
      %v682 = vsel %vm263, %v668, 0
      %684 = vmatprep.subr.bf16.mxu0 %v679
      %685 = vmatpush1.bf16.msra.mxu0 %v676
      %686 = vmatprep.subr.bf16.mxu0 0
      %687 = vmatpush1.bf16.msra.mxu0 0
      %688 = vmatprep.subr.bf16.mxu0 0
      %689 = vmatpush1.bf16.msra.mxu0 0
      %690 = vmatprep.subr.bf16.mxu0 0
      %691 = vmatpush1.bf16.msra.mxu0 0
      %692 = vmatprep.subr.bf16.mxu0 0
      %693 = vmatpush1.bf16.msra.mxu0 0
      %694 = vmatprep.subr.bf16.mxu0 0
      %695 = vmatpush1.bf16.msra.mxu0 0
      %696 = vmatprep.subr.bf16.mxu0 0
      %697 = vmatpush1.bf16.msra.mxu0 0
      %698 = vmatprep.subr.bf16.mxu0 0
      %699 = vmatpush1.bf16.msra.mxu0 0
      %700 = vmatprep.subr.bf16.mxu0 0
      %701 = vmatpush1.bf16.msra.mxu0 0
      %702 = vmatprep.subr.bf16.mxu0 0
      %703 = vmatpush1.bf16.msra.mxu0 0
      %704 = vmatprep.subr.bf16.mxu0 0
      %705 = vmatpush1.bf16.msra.mxu0 0
      %706 = vmatprep.subr.bf16.mxu0 0
      %707 = vmatpush1.bf16.msra.mxu0 0
      %708 = vmatprep.subr.bf16.mxu0 0
      %709 = vmatpush1.bf16.msra.mxu0 0
      %710 = vmatprep.subr.bf16.mxu0 0
      %711 = vmatpush1.bf16.msra.mxu0 0
      %712 = vmatprep.subr.bf16.mxu0 0
      %713 = vmatpush1.bf16.msra.mxu0 0
      %714 = vmatprep.subr.bf16.mxu0 0
      %715 = vmatpush1.bf16.msra.mxu0 0
      %716 = vmatprep.mubr.bf16.mxu0 0
      %717 = vmatmul.mubr.bf16.gmra.mrb[0].mxu0 %v673
      %v718 = vpop.f32.mrb[0].mxu0
      %v719 = vadd.f32 0.0, %v718
      %v720 = vpop.f32.mrb[0].mxu0
      %v721 = vadd.f32 0.0, %v720
      %v722 = vpop.f32.mrb[0].mxu0
      %v723 = vpop.f32.mrb[0].mxu0
      %724 = vdwg.mxu0
      %725 = vmatprep.subr.bf16.mxu0 0
      %726 = vmatpush1.bf16.msra.mxu0 %v682
      %727 = vmatprep.subr.bf16.mxu0 0
      %728 = vmatpush1.bf16.msra.mxu0 0
      %729 = vmatprep.subr.bf16.mxu0 0
      %730 = vmatpush1.bf16.msra.mxu0 0
      %731 = vmatprep.subr.bf16.mxu0 0
      %732 = vmatpush1.bf16.msra.mxu0 0
      %733 = vmatprep.subr.bf16.mxu0 0
      %734 = vmatpush1.bf16.msra.mxu0 0
      %735 = vmatprep.subr.bf16.mxu0 0
      %736 = vmatpush1.bf16.msra.mxu0 0
      %737 = vmatprep.subr.bf16.mxu0 0
      %738 = vmatpush1.bf16.msra.mxu0 0
      %739 = vmatprep.subr.bf16.mxu0 0
      %740 = vmatpush1.bf16.msra.mxu0 0
      %741 = vmatprep.subr.bf16.mxu0 0
      %742 = vmatpush1.bf16.msra.mxu0 0
      %743 = vmatprep.subr.bf16.mxu0 0
      %744 = vmatpush1.bf16.msra.mxu0 0
      %745 = vmatprep.subr.bf16.mxu0 0
      %746 = vmatpush1.bf16.msra.mxu0 0
      %747 = vmatprep.subr.bf16.mxu0 0
      %748 = vmatpush1.bf16.msra.mxu0 0
      %749 = vmatprep.subr.bf16.mxu0 0
      %750 = vmatpush1.bf16.msra.mxu0 0
      %751 = vmatprep.subr.bf16.mxu0 0
      %752 = vmatpush1.bf16.msra.mxu0 0
      %753 = vmatprep.subr.bf16.mxu0 0
      %754 = vmatpush1.bf16.msra.mxu0 0
      %755 = vmatprep.subr.bf16.mxu0 0
      %756 = vmatpush1.bf16.msra.mxu0 0
      %757 = vmatprep.mubr.bf16.mxu0 0
      %758 = vmatmul.mubr.bf16.gmra.mrb[0].mxu0 %v673
      %v759 = vpop.f32.mrb[0].mxu0
      %v760 = vadd.f32 0.0, %v759
      %v761 = vpop.f32.mrb[0].mxu0
      %v762 = vpop.f32.mrb[0].mxu0
      %v763 = vpop.f32.mrb[0].mxu0
      %764 = vdwg.mxu0
      %v765 = vadd.f32 %v658, %v719
      %v766 = vadd.f32 %v659, %v721
      %v767 = vadd.f32 %v660, %v760
      %768 = vrot.lane.b32.xlu0 %v230, 108
      %v769 = vpop.permute.xlu0 %768
      %770 = vrot.lane.b32.xlu0 %v241, 108
      %v771 = vpop.permute.xlu0 %770
      %772 = vrot.lane.b32.xlu0 %v249, 108
      %v773 = vpop.permute.xlu0 %772
      %774 = vrot.lane.b32.xlu0 %v248, 108
      %v775 = vpop.permute.xlu0 %774
      %vm776 = vcmask 883712
      %v777 = vsel %vm776, %v771, %v773
      %v778 = vsel %vm776, %v773, %v775
      %v780 = vsel %vm259, %v769, 0
      %v783 = vsel %vm263, %v777, 0
      %v786 = vsel %vm263, %v778, 0
      %v789 = vsel %vm263, %v775, 0
      %791 = vmatprep.subr.bf16.mxu0 %v786
      %792 = vmatpush1.bf16.msra.mxu0 %v783
      %793 = vmatprep.subr.bf16.mxu0 0
      %794 = vmatpush1.bf16.msra.mxu0 0
      %795 = vmatprep.subr.bf16.mxu0 0
      %796 = vmatpush1.bf16.msra.mxu0 0
      %797 = vmatprep.subr.bf16.mxu0 0
      %798 = vmatpush1.bf16.msra.mxu0 0
      %799 = vmatprep.subr.bf16.mxu0 0
      %800 = vmatpush1.bf16.msra.mxu0 0
      %801 = vmatprep.subr.bf16.mxu0 0
      %802 = vmatpush1.bf16.msra.mxu0 0
      %803 = vmatprep.subr.bf16.mxu0 0
      %804 = vmatpush1.bf16.msra.mxu0 0
      %805 = vmatprep.subr.bf16.mxu0 0
      %806 = vmatpush1.bf16.msra.mxu0 0
      %807 = vmatprep.subr.bf16.mxu0 0
      %808 = vmatpush1.bf16.msra.mxu0 0
      %809 = vmatprep.subr.bf16.mxu0 0
      %810 = vmatpush1.bf16.msra.mxu0 0
      %811 = vmatprep.subr.bf16.mxu0 0
      %812 = vmatpush1.bf16.msra.mxu0 0
      %813 = vmatprep.subr.bf16.mxu0 0
      %814 = vmatpush1.bf16.msra.mxu0 0
      %815 = vmatprep.subr.bf16.mxu0 0
      %816 = vmatpush1.bf16.msra.mxu0 0
      %817 = vmatprep.subr.bf16.mxu0 0
      %818 = vmatpush1.bf16.msra.mxu0 0
      %819 = vmatprep.subr.bf16.mxu0 0
      %820 = vmatpush1.bf16.msra.mxu0 0
      %821 = vmatprep.subr.bf16.mxu0 0
      %822 = vmatpush1.bf16.msra.mxu0 0
      %823 = vmatprep.mubr.bf16.mxu0 0
      %824 = vmatmul.mubr.bf16.gmra.mrb[0].mxu0 %v780
      %v825 = vpop.f32.mrb[0].mxu0
      %v826 = vadd.f32 0.0, %v825
      %v827 = vpop.f32.mrb[0].mxu0
      %v828 = vadd.f32 0.0, %v827
      %v829 = vpop.f32.mrb[0].mxu0
      %v830 = vpop.f32.mrb[0].mxu0
      %831 = vdwg.mxu0
      %832 = vmatprep.subr.bf16.mxu0 0
      %833 = vmatpush1.bf16.msra.mxu0 %v789
      %834 = vmatprep.subr.bf16.mxu0 0
      %835 = vmatpush1.bf16.msra.mxu0 0
      %836 = vmatprep.subr.bf16.mxu0 0
      %837 = vmatpush1.bf16.msra.mxu0 0
      %838 = vmatprep.subr.bf16.mxu0 0
      %839 = vmatpush1.bf16.msra.mxu0 0
      %840 = vmatprep.subr.bf16.mxu0 0
      %841 = vmatpush1.bf16.msra.mxu0 0
      %842 = vmatprep.subr.bf16.mxu0 0
      %843 = vmatpush1.bf16.msra.mxu0 0
      %844 = vmatprep.subr.bf16.mxu0 0
      %845 = vmatpush1.bf16.msra.mxu0 0
      %846 = vmatprep.subr.bf16.mxu0 0
      %847 = vmatpush1.bf16.msra.mxu0 0
      %848 = vmatprep.subr.bf16.mxu0 0
      %849 = vmatpush1.bf16.msra.mxu0 0
      %850 = vmatprep.subr.bf16.mxu0 0
      %851 = vmatpush1.bf16.msra.mxu0 0
      %852 = vmatprep.subr.bf16.mxu0 0
      %853 = vmatpush1.bf16.msra.mxu0 0
      %854 = vmatprep.subr.bf16.mxu0 0
      %855 = vmatpush1.bf16.msra.mxu0 0
      %856 = vmatprep.subr.bf16.mxu0 0
      %857 = vmatpush1.bf16.msra.mxu0 0
      %858 = vmatprep.subr.bf16.mxu0 0
      %859 = vmatpush1.bf16.msra.mxu0 0
      %860 = vmatprep.subr.bf16.mxu0 0
      %861 = vmatpush1.bf16.msra.mxu0 0
      %862 = vmatprep.subr.bf16.mxu0 0
      %863 = vmatpush1.bf16.msra.mxu0 0
      %864 = vmatprep.mubr.bf16.mxu0 0
      %865 = vmatmul.mubr.bf16.gmra.mrb[0].mxu0 %v780
      %v866 = vpop.f32.mrb[0].mxu0
      %v867 = vadd.f32 0.0, %v866
      %v868 = vpop.f32.mrb[0].mxu0
      %v869 = vpop.f32.mrb[0].mxu0
      %v870 = vpop.f32.mrb[0].mxu0
      %871 = vdwg.mxu0
      %v872 = vadd.f32 %v765, %v826
      %v873 = vadd.f32 %v766, %v828
      %v874 = vadd.f32 %v767, %v867
      %875 = vrot.lane.b32.xlu0 %v230, 104
      %v876 = vpop.permute.xlu0 %875
      %877 = vrot.lane.b32.xlu0 %v241, 92
      %v878 = vpop.permute.xlu0 %877
      %879 = vrot.lane.b32.xlu0 %v249, 92
      %v880 = vpop.permute.xlu0 %879
      %881 = vrot.lane.b32.xlu0 %v248, 92
      %v882 = vpop.permute.xlu0 %881
      %vm883 = vcmask 752640
      %v884 = vsel %vm883, %v878, %v880
      %v885 = vsel %vm883, %v880, %v882
      %v887 = vsel %vm259, %v876, 0
      %v890 = vsel %vm263, %v884, 0
      %v893 = vsel %vm263, %v885, 0
      %v896 = vsel %vm263, %v882, 0
      %898 = vmatprep.subr.bf16.mxu0 %v893
      %899 = vmatpush1.bf16.msra.mxu0 %v890
      %900 = vmatprep.subr.bf16.mxu0 0
      %901 = vmatpush1.bf16.msra.mxu0 0
      %902 = vmatprep.subr.bf16.mxu0 0
      %903 = vmatpush1.bf16.msra.mxu0 0
      %904 = vmatprep.subr.bf16.mxu0 0
      %905 = vmatpush1.bf16.msra.mxu0 0
      %906 = vmatprep.subr.bf16.mxu0 0
      %907 = vmatpush1.bf16.msra.mxu0 0
      %908 = vmatprep.subr.bf16.mxu0 0
      %909 = vmatpush1.bf16.msra.mxu0 0
      %910 = vmatprep.subr.bf16.mxu0 0
      %911 = vmatpush1.bf16.msra.mxu0 0
      %912 = vmatprep.subr.bf16.mxu0 0
      %913 = vmatpush1.bf16.msra.mxu0 0
      %914 = vmatprep.subr.bf16.mxu0 0
      %915 = vmatpush1.bf16.msra.mxu0 0
      %916 = vmatprep.subr.bf16.mxu0 0
      %917 = vmatpush1.bf16.msra.mxu0 0
      %918 = vmatprep.subr.bf16.mxu0 0
      %919 = vmatpush1.bf16.msra.mxu0 0
      %920 = vmatprep.subr.bf16.mxu0 0
      %921 = vmatpush1.bf16.msra.mxu0 0
      %922 = vmatprep.subr.bf16.mxu0 0
      %923 = vmatpush1.bf16.msra.mxu0 0
      %924 = vmatprep.subr.bf16.mxu0 0
      %925 = vmatpush1.bf16.msra.mxu0 0
      %926 = vmatprep.subr.bf16.mxu0 0
      %927 = vmatpush1.bf16.msra.mxu0 0
      %928 = vmatprep.subr.bf16.mxu0 0
      %929 = vmatpush1.bf16.msra.mxu0 0
      %930 = vmatprep.mubr.bf16.mxu0 0
      %931 = vmatmul.mubr.bf16.gmra.mrb[0].mxu0 %v887
      %v932 = vpop.f32.mrb[0].mxu0
      %v933 = vadd.f32 0.0, %v932
      %v934 = vpop.f32.mrb[0].mxu0
      %v935 = vadd.f32 0.0, %v934
      %v936 = vpop.f32.mrb[0].mxu0
      %v937 = vpop.f32.mrb[0].mxu0
      %938 = vdwg.mxu0
      %939 = vmatprep.subr.bf16.mxu0 0
      %940 = vmatpush1.bf16.msra.mxu0 %v896
      %941 = vmatprep.subr.bf16.mxu0 0
      %942 = vmatpush1.bf16.msra.mxu0 0
      %943 = vmatprep.subr.bf16.mxu0 0
      %944 = vmatpush1.bf16.msra.mxu0 0
      %945 = vmatprep.subr.bf16.mxu0 0
      %946 = vmatpush1.bf16.msra.mxu0 0
      %947 = vmatprep.subr.bf16.mxu0 0
      %948 = vmatpush1.bf16.msra.mxu0 0
      %949 = vmatprep.subr.bf16.mxu0 0
      %950 = vmatpush1.bf16.msra.mxu0 0
      %951 = vmatprep.subr.bf16.mxu0 0
      %952 = vmatpush1.bf16.msra.mxu0 0
      %953 = vmatprep.subr.bf16.mxu0 0
      %954 = vmatpush1.bf16.msra.mxu0 0
      %955 = vmatprep.subr.bf16.mxu0 0
      %956 = vmatpush1.bf16.msra.mxu0 0
      %957 = vmatprep.subr.bf16.mxu0 0
      %958 = vmatpush1.bf16.msra.mxu0 0
      %959 = vmatprep.subr.bf16.mxu0 0
      %960 = vmatpush1.bf16.msra.mxu0 0
      %961 = vmatprep.subr.bf16.mxu0 0
      %962 = vmatpush1.bf16.msra.mxu0 0
      %963 = vmatprep.subr.bf16.mxu0 0
      %964 = vmatpush1.bf16.msra.mxu0 0
      %965 = vmatprep.subr.bf16.mxu0 0
      %966 = vmatpush1.bf16.msra.mxu0 0
      %967 = vmatprep.subr.bf16.mxu0 0
      %968 = vmatpush1.bf16.msra.mxu0 0
      %969 = vmatprep.subr.bf16.mxu0 0
      %970 = vmatpush1.bf16.msra.mxu0 0
      %971 = vmatprep.mubr.bf16.mxu0 0
      %972 = vmatmul.mubr.bf16.gmra.mrb[0].mxu0 %v887
      %v973 = vpop.f32.mrb[0].mxu0
      %v974 = vadd.f32 0.0, %v973
      %v975 = vpop.f32.mrb[0].mxu0
      %v976 = vpop.f32.mrb[0].mxu0
      %v977 = vpop.f32.mrb[0].mxu0
      %978 = vdwg.mxu0
      %v979 = vadd.f32 %v872, %v933
      %v980 = vadd.f32 %v873, %v935
      %v981 = vadd.f32 %v874, %v974
      %982 = vrot.lane.b32.xlu0 %v230, 100
      %v983 = vpop.permute.xlu0 %982
      %984 = vrot.lane.b32.xlu0 %v241, 91
      %v985 = vpop.permute.xlu0 %984
      %986 = vrot.lane.b32.xlu0 %v249, 91
      %v987 = vpop.permute.xlu0 %986
      %988 = vrot.lane.b32.xlu0 %v248, 91
      %v989 = vpop.permute.xlu0 %988
      %vm990 = vcmask 744448
      %v991 = vsel %vm990, %v985, %v987
      %v992 = vsel %vm990, %v987, %v989
      %v994 = vsel %vm259, %v983, 0
      %v997 = vsel %vm263, %v991, 0
      %v1000 = vsel %vm263, %v992, 0
      %v1003 = vsel %vm263, %v989, 0
      %1005 = vmatprep.subr.bf16.mxu0 %v1000
      %1006 = vmatpush1.bf16.msra.mxu0 %v997
      %1007 = vmatprep.subr.bf16.mxu0 0
      %1008 = vmatpush1.bf16.msra.mxu0 0
      %1009 = vmatprep.subr.bf16.mxu0 0
      %1010 = vmatpush1.bf16.msra.mxu0 0
      %1011 = vmatprep.subr.bf16.mxu0 0
      %1012 = vmatpush1.bf16.msra.mxu0 0
      %1013 = vmatprep.subr.bf16.mxu0 0
      %1014 = vmatpush1.bf16.msra.mxu0 0
      %1015 = vmatprep.subr.bf16.mxu0 0
      %1016 = vmatpush1.bf16.msra.mxu0 0
      %1017 = vmatprep.subr.bf16.mxu0 0
      %1018 = vmatpush1.bf16.msra.mxu0 0
      %1019 = vmatprep.subr.bf16.mxu0 0
      %1020 = vmatpush1.bf16.msra.mxu0 0
      %1021 = vmatprep.subr.bf16.mxu0 0
      %1022 = vmatpush1.bf16.msra.mxu0 0
      %1023 = vmatprep.subr.bf16.mxu0 0
      %1024 = vmatpush1.bf16.msra.mxu0 0
      %1025 = vmatprep.subr.bf16.mxu0 0
      %1026 = vmatpush1.bf16.msra.mxu0 0
      %1027 = vmatprep.subr.bf16.mxu0 0
      %1028 = vmatpush1.bf16.msra.mxu0 0
      %1029 = vmatprep.subr.bf16.mxu0 0
      %1030 = vmatpush1.bf16.msra.mxu0 0
      %1031 = vmatprep.subr.bf16.mxu0 0
      %1032 = vmatpush1.bf16.msra.mxu0 0
      %1033 = vmatprep.subr.bf16.mxu0 0
      %1034 = vmatpush1.bf16.msra.mxu0 0
      %1035 = vmatprep.subr.bf16.mxu0 0
      %1036 = vmatpush1.bf16.msra.mxu0 0
      %1037 = vmatprep.mubr.bf16.mxu0 0
      %1038 = vmatmul.mubr.bf16.gmra.mrb[0].mxu0 %v994
      %v1039 = vpop.f32.mrb[0].mxu0
      %v1040 = vadd.f32 0.0, %v1039
      %v1041 = vpop.f32.mrb[0].mxu0
      %v1042 = vadd.f32 0.0, %v1041
      %v1043 = vpop.f32.mrb[0].mxu0
      %v1044 = vpop.f32.mrb[0].mxu0
      %1045 = vdwg.mxu0
      %1046 = vmatprep.subr.bf16.mxu0 0
      %1047 = vmatpush1.bf16.msra.mxu0 %v1003
      %1048 = vmatprep.subr.bf16.mxu0 0
      %1049 = vmatpush1.bf16.msra.mxu0 0
      %1050 = vmatprep.subr.bf16.mxu0 0
      %1051 = vmatpush1.bf16.msra.mxu0 0
      %1052 = vmatprep.subr.bf16.mxu0 0
      %1053 = vmatpush1.bf16.msra.mxu0 0
      %1054 = vmatprep.subr.bf16.mxu0 0
      %1055 = vmatpush1.bf16.msra.mxu0 0
      %1056 = vmatprep.subr.bf16.mxu0 0
      %1057 = vmatpush1.bf16.msra.mxu0 0
      %1058 = vmatprep.subr.bf16.mxu0 0
      %1059 = vmatpush1.bf16.msra.mxu0 0
      %1060 = vmatprep.subr.bf16.mxu0 0
      %1061 = vmatpush1.bf16.msra.mxu0 0
      %1062 = vmatprep.subr.bf16.mxu0 0
      %1063 = vmatpush1.bf16.msra.mxu0 0
      %1064 = vmatprep.subr.bf16.mxu0 0
      %1065 = vmatpush1.bf16.msra.mxu0 0
      %1066 = vmatprep.subr.bf16.mxu0 0
      %1067 = vmatpush1.bf16.msra.mxu0 0
      %1068 = vmatprep.subr.bf16.mxu0 0
      %1069 = vmatpush1.bf16.msra.mxu0 0
      %1070 = vmatprep.subr.bf16.mxu0 0
      %1071 = vmatpush1.bf16.msra.mxu0 0
      %1072 = vmatprep.subr.bf16.mxu0 0
      %1073 = vmatpush1.bf16.msra.mxu0 0
      %1074 = vmatprep.subr.bf16.mxu0 0
      %1075 = vmatpush1.bf16.msra.mxu0 0
      %1076 = vmatprep.subr.bf16.mxu0 0
      %1077 = vmatpush1.bf16.msra.mxu0 0
      %1078 = vmatprep.mubr.bf16.mxu0 0
      %1079 = vmatmul.mubr.bf16.gmra.mrb[0].mxu0 %v994
      %v1080 = vpop.f32.mrb[0].mxu0
      %v1081 = vadd.f32 0.0, %v1080
      %v1082 = vpop.f32.mrb[0].mxu0
      %v1083 = vpop.f32.mrb[0].mxu0
      %v1084 = vpop.f32.mrb[0].mxu0
      %1085 = vdwg.mxu0
      %v1086 = vadd.f32 %v979, %v1040
      %v1087 = vadd.f32 %v980, %v1042
      %v1088 = vadd.f32 %v981, %v1081
      %1089 = vrot.lane.b32.xlu0 %v230, 96
      %v1090 = vpop.permute.xlu0 %1089
      %1091 = vrot.lane.b32.xlu0 %v241, 90
      %v1092 = vpop.permute.xlu0 %1091
      %1093 = vrot.lane.b32.xlu0 %v249, 90
      %v1094 = vpop.permute.xlu0 %1093
      %1095 = vrot.lane.b32.xlu0 %v248, 90
      %v1096 = vpop.permute.xlu0 %1095
      %vm1097 = vcmask 736256
      %v1098 = vsel %vm1097, %v1092, %v1094
      %v1099 = vsel %vm1097, %v1094, %v1096
      %v1101 = vsel %vm259, %v1090, 0
      %v1104 = vsel %vm263, %v1098, 0
      %v1107 = vsel %vm263, %v1099, 0
      %v1110 = vsel %vm263, %v1096, 0
      %1112 = vmatprep.subr.bf16.mxu0 %v1107
      %1113 = vmatpush1.bf16.msra.mxu0 %v1104
      %1114 = vmatprep.subr.bf16.mxu0 0
      %1115 = vmatpush1.bf16.msra.mxu0 0
      %1116 = vmatprep.subr.bf16.mxu0 0
      %1117 = vmatpush1.bf16.msra.mxu0 0
      %1118 = vmatprep.subr.bf16.mxu0 0
      %1119 = vmatpush1.bf16.msra.mxu0 0
      %1120 = vmatprep.subr.bf16.mxu0 0
      %1121 = vmatpush1.bf16.msra.mxu0 0
      %1122 = vmatprep.subr.bf16.mxu0 0
      %1123 = vmatpush1.bf16.msra.mxu0 0
      %1124 = vmatprep.subr.bf16.mxu0 0
      %1125 = vmatpush1.bf16.msra.mxu0 0
      %1126 = vmatprep.subr.bf16.mxu0 0
      %1127 = vmatpush1.bf16.msra.mxu0 0
      %1128 = vmatprep.subr.bf16.mxu0 0
      %1129 = vmatpush1.bf16.msra.mxu0 0
      %1130 = vmatprep.subr.bf16.mxu0 0
      %1131 = vmatpush1.bf16.msra.mxu0 0
      %1132 = vmatprep.subr.bf16.mxu0 0
      %1133 = vmatpush1.bf16.msra.mxu0 0
      %1134 = vmatprep.subr.bf16.mxu0 0
      %1135 = vmatpush1.bf16.msra.mxu0 0
      %1136 = vmatprep.subr.bf16.mxu0 0
      %1137 = vmatpush1.bf16.msra.mxu0 0
      %1138 = vmatprep.subr.bf16.mxu0 0
      %1139 = vmatpush1.bf16.msra.mxu0 0
      %1140 = vmatprep.subr.bf16.mxu0 0
      %1141 = vmatpush1.bf16.msra.mxu0 0
      %1142 = vmatprep.subr.bf16.mxu0 0
      %1143 = vmatpush1.bf16.msra.mxu0 0
      %1144 = vmatprep.mubr.bf16.mxu0 0
      %1145 = vmatmul.mubr.bf16.gmra.mrb[0].mxu0 %v1101
      %v1146 = vpop.f32.mrb[0].mxu0
      %v1147 = vadd.f32 0.0, %v1146
      %v1148 = vpop.f32.mrb[0].mxu0
      %v1149 = vadd.f32 0.0, %v1148
      %v1150 = vpop.f32.mrb[0].mxu0
      %v1151 = vpop.f32.mrb[0].mxu0
      %1152 = vdwg.mxu0
      %1153 = vmatprep.subr.bf16.mxu0 0
      %1154 = vmatpush1.bf16.msra.mxu0 %v1110
      %1155 = vmatprep.subr.bf16.mxu0 0
      %1156 = vmatpush1.bf16.msra.mxu0 0
      %1157 = vmatprep.subr.bf16.mxu0 0
      %1158 = vmatpush1.bf16.msra.mxu0 0
      %1159 = vmatprep.subr.bf16.mxu0 0
      %1160 = vmatpush1.bf16.msra.mxu0 0
      %1161 = vmatprep.subr.bf16.mxu0 0
      %1162 = vmatpush1.bf16.msra.mxu0 0
      %1163 = vmatprep.subr.bf16.mxu0 0
      %1164 = vmatpush1.bf16.msra.mxu0 0
      %1165 = vmatprep.subr.bf16.mxu0 0
      %1166 = vmatpush1.bf16.msra.mxu0 0
      %1167 = vmatprep.subr.bf16.mxu0 0
      %1168 = vmatpush1.bf16.msra.mxu0 0
      %1169 = vmatprep.subr.bf16.mxu0 0
      %1170 = vmatpush1.bf16.msra.mxu0 0
      %1171 = vmatprep.subr.bf16.mxu0 0
      %1172 = vmatpush1.bf16.msra.mxu0 0
      %1173 = vmatprep.subr.bf16.mxu0 0
      %1174 = vmatpush1.bf16.msra.mxu0 0
      %1175 = vmatprep.subr.bf16.mxu0 0
      %1176 = vmatpush1.bf16.msra.mxu0 0
      %1177 = vmatprep.subr.bf16.mxu0 0
      %1178 = vmatpush1.bf16.msra.mxu0 0
      %1179 = vmatprep.subr.bf16.mxu0 0
      %1180 = vmatpush1.bf16.msra.mxu0 0
      %1181 = vmatprep.subr.bf16.mxu0 0
      %1182 = vmatpush1.bf16.msra.mxu0 0
      %1183 = vmatprep.subr.bf16.mxu0 0
      %1184 = vmatpush1.bf16.msra.mxu0 0
      %1185 = vmatprep.mubr.bf16.mxu0 0
      %1186 = vmatmul.mubr.bf16.gmra.mrb[0].mxu0 %v1101
      %v1187 = vpop.f32.mrb[0].mxu0
      %v1188 = vadd.f32 0.0, %v1187
      %v1189 = vpop.f32.mrb[0].mxu0
      %v1190 = vpop.f32.mrb[0].mxu0
      %v1191 = vpop.f32.mrb[0].mxu0
      %1192 = vdwg.mxu0
      %v1193 = vadd.f32 %v1086, %v1147
      %v1194 = vadd.f32 %v1087, %v1149
      %v1195 = vadd.f32 %v1088, %v1188
      %v1196 = vld [vmem:[%s2] sm:$0xff]
      %1198 = vset.pattern.permute.xlu0 0
      %1199 = vperm.xlu0 %1198, %v1196
      %v1200 = vpop.permute.xlu0 %1199
      %v1202 = vadd.f32 %v1193, %v1200
      %v1203 = vadd.f32 %v1194, %v1200
      %v1204 = vadd.f32 %v1195, %v1200
      %v1205 = vmax.f32 %v1202, 0.0
      %v1206 = vmax.f32 %v1203, 0.0
      %v1207 = vmax.f32 %v1204, 0.0
      %v1208 = vlaneseq
      %v1209 = vand.u32 %v1208, 127
      %v1210 = vadd.s32 %v1209, 128
      %v1211 = vadd.s32 %v1209, 256
      %vm1212 = vcmp.lt.s32.totalorder %v1209, 0
      %v1213 = vsub.s32 0, %v1209
      %v1214 = vsel %vm1212, %v1213, %v1209
      %v1215 = vmul.u32.u64.compose %v1214, 3817748708
      %v1216 = vextract.low.u32 %v1215
      %v1217 = vextract.high.u32 %v1215
      %v1218 = vshrl.u32 %v1217, 4
      %v1219 = vmul.u32 %v1218, 18
      %v1220 = vsub.s32 %v1214, %v1219
      %v1221 = vsub.s32 0, %v1220
      %v1222 = vsel %vm1212, %v1221, %v1220
      %vm1223 = vcmp.lt.s32.totalorder %v1210, 0
      %v1224 = vsub.s32 0, %v1210
      %v1225 = vsel %vm1223, %v1224, %v1210
      %v1226 = vmul.u32.u64.compose %v1225, 3817748708
      %v1227 = vextract.low.u32 %v1226
      %v1228 = vextract.high.u32 %v1226
      %v1229 = vshrl.u32 %v1228, 4
      %v1230 = vmul.u32 %v1229, 18
      %v1231 = vsub.s32 %v1225, %v1230
      %v1232 = vsub.s32 0, %v1231
      %v1233 = vsel %vm1223, %v1232, %v1231
      %vm1234 = vcmp.lt.s32.totalorder %v1211, 0
      %v1235 = vsub.s32 0, %v1211
      %v1236 = vsel %vm1234, %v1235, %v1211
      %v1237 = vmul.u32.u64.compose %v1236, 3817748708
      %v1238 = vextract.low.u32 %v1237
      %v1239 = vextract.high.u32 %v1237
      %v1240 = vshrl.u32 %v1239, 4
      %v1241 = vmul.u32 %v1240, 18
      %v1242 = vsub.s32 %v1236, %v1241
      %v1243 = vsub.s32 0, %v1242
      %v1244 = vsel %vm1234, %v1243, %v1242
      %vm1245 = vcmp.ne.s32.totalorder %v1222, 0
      %vm1246 = vcmp.ne.s32.totalorder %v1233, 0
      %vm1247 = vcmp.ne.s32.totalorder %v1244, 0
      %vm1248 = vcmp.lt.s32.totalorder %v1222, 0
      %vm1249 = vcmp.lt.s32.totalorder %v1233, 0
      %vm1250 = vcmp.lt.s32.totalorder %v1244, 0
      %vm1251 = vmand %vm1248, %vm1245
      %vm1252 = vmand %vm1249, %vm1246
      %vm1253 = vmand %vm1250, %vm1247
      %v1254 = vadd.s32 %v1222, 18
      %v1255 = vadd.s32 %v1233, 18
      %v1256 = vadd.s32 %v1244, 18
      %v1257 = vsel %vm1251, %v1254, %v1222
      %v1258 = vsel %vm1252, %v1255, %v1233
      %v1259 = vsel %vm1253, %v1256, %v1244
      %vm1260 = vcmp.lt.s32.totalorder %v1257, 16
      %vm1261 = vcmp.lt.s32.totalorder %v1258, 16
      %vm1262 = vcmp.lt.s32.totalorder %v1259, 16
      %v1263 = vsel %vm1260, %v1205, 0.0
      %v1264 = vsel %vm1261, %v1206, 0.0
      %v1265 = vsel %vm1262, %v1207, 0.0
      %1266 = vst [vmem:[#allocation2] sm:$0xff] 0.0
      %1267 = vst [vmem:[#allocation2 + $0x8] sm:$0xff] 0.0
      %vm1268 = vcmask 703488
      %1269 = vst.msk [vmem:[#allocation2 + $0x10] sm:$0xff] %vm1268, 0.0
      %1273 = vrot.lane.b32.xlu0 %v1263, 19
      %v1274 = vpop.permute.xlu0 %1273
      %1275 = vrot.lane.b32.xlu0 %v1264, 19
      %v1276 = vpop.permute.xlu0 %1275
      %1277 = vrot.lane.b32.xlu0 %v1265, 19
      %v1278 = vpop.permute.xlu0 %1277
      %vm1279 = vcmask 154624
      %v1280 = vsel %vm1279, %v1274, %v1276
      %v1281 = vsel %vm1279, %v1276, %v1278
      %vm1285 = vcmask 1047704
      %1286 = vst.msk [vmem:[#allocation2] sm:$0xff] %vm1285, %v1274
      %1287 = vst [vmem:[#allocation2 + $0x8] sm:$0xff] %v1280
      %vm1288 = vcmask 416768
      %1289 = vst.msk [vmem:[#allocation2 + $0x10] sm:$0xff] %vm1288, %v1281
      %v1290 = vld [vmem:[#allocation2] sm:$0xff]
      %v1291 = vld [vmem:[#allocation2 + $0x8] sm:$0xff]
      %v1292 = vld [vmem:[#allocation2 + $0x10] sm:$0xff]
      %v1293 = vld [vmem:[%s3] sm:$0xf]
      %v1294 = vpack.c.bf16 %v1290, %v1290
      %v1295 = vpack.c.bf16 %v1291, %v1291
      %v1296 = vpack.c.bf16 %v1292, %v1292
      %v1298 = vunpack.c.l.b16 %v1293
      %v1299 = vpack.c.b16 %v1298, %v1298
      %1300 = vrot.lane.b32.xlu0 %v1299, 120
      %v1301 = vpop.permute.xlu0 %1300
      %1305 = vrot.lane.b32.xlu0 %v1294, 127
      %v1306 = vpop.permute.xlu0 %1305
      %1307 = vrot.lane.b32.xlu0 %v1295, 127
      %v1308 = vpop.permute.xlu0 %1307
      %1309 = vrot.lane.b32.xlu0 %v1296, 127
      %v1310 = vpop.permute.xlu0 %1309
      %v1311 = vsel %vm256, %v1306, %v1308
      %v1312 = vsel %vm256, %v1308, %v1310
      %vm1313 = vcmask 64512
      %v1315 = vsel %vm1313, %v1301, 0
      %vm1317 = vcmask 1043456
      %v1319 = vsel %vm1317, %v1311, 0
      %v1322 = vsel %vm1317, %v1312, 0
      %v1325 = vsel %vm1317, %v1310, 0
      %1327 = vmatprep.subr.bf16.mxu0 %v1322
      %1328 = vmatpush1.bf16.msra.mxu0 %v1319
      %1329 = vmatprep.subr.bf16.mxu0 0
      %1330 = vmatpush1.bf16.msra.mxu0 0
      %1331 = vmatprep.subr.bf16.mxu0 0
      %1332 = vmatpush1.bf16.msra.mxu0 0
      %1333 = vmatprep.subr.bf16.mxu0 0
      %1334 = vmatpush1.bf16.msra.mxu0 0
      %1335 = vmatprep.subr.bf16.mxu0 0
      %1336 = vmatpush1.bf16.msra.mxu0 0
      %1337 = vmatprep.subr.bf16.mxu0 0
      %1338 = vmatpush1.bf16.msra.mxu0 0
      %1339 = vmatprep.subr.bf16.mxu0 0
      %1340 = vmatpush1.bf16.msra.mxu0 0
      %1341 = vmatprep.subr.bf16.mxu0 0
      %1342 = vmatpush1.bf16.msra.mxu0 0
      %1343 = vmatprep.subr.bf16.mxu0 0
      %1344 = vmatpush1.bf16.msra.mxu0 0
      %1345 = vmatprep.subr.bf16.mxu0 0
      %1346 = vmatpush1.bf16.msra.mxu0 0
      %1347 = vmatprep.subr.bf16.mxu0 0
      %1348 = vmatpush1.bf16.msra.mxu0 0
      %1349 = vmatprep.subr.bf16.mxu0 0
      %1350 = vmatpush1.bf16.msra.mxu0 0
      %1351 = vmatprep.subr.bf16.mxu0 0
      %1352 = vmatpush1.bf16.msra.mxu0 0
      %1353 = vmatprep.subr.bf16.mxu0 0
      %1354 = vmatpush1.bf16.msra.mxu0 0
      %1355 = vmatprep.subr.bf16.mxu0 0
      %1356 = vmatpush1.bf16.msra.mxu0 0
      %1357 = vmatprep.subr.bf16.mxu0 0
      %1358 = vmatpush1.bf16.msra.mxu0 0
      %1359 = vmatprep.mubr.bf16.mxu0 0
      %1360 = vmatmul.mubr.bf16.gmra.mrb[0].mxu0 %v1315
      %v1361 = vpop.f32.mrb[0].mxu0
      %v1362 = vadd.f32 0.0, %v1361
      %v1363 = vpop.f32.mrb[0].mxu0
      %v1364 = vadd.f32 0.0, %v1363
      %v1365 = vpop.f32.mrb[0].mxu0
      %v1366 = vpop.f32.mrb[0].mxu0
      %1367 = vdwg.mxu0
      %1368 = vmatprep.subr.bf16.mxu0 0
      %1369 = vmatpush1.bf16.msra.mxu0 %v1325
      %1370 = vmatprep.subr.bf16.mxu0 0
      %1371 = vmatpush1.bf16.msra.mxu0 0
      %1372 = vmatprep.subr.bf16.mxu0 0
      %1373 = vmatpush1.bf16.msra.mxu0 0
      %1374 = vmatprep.subr.bf16.mxu0 0
      %1375 = vmatpush1.bf16.msra.mxu0 0
      %1376 = vmatprep.subr.bf16.mxu0 0
      %1377 = vmatpush1.bf16.msra.mxu0 0
      %1378 = vmatprep.subr.bf16.mxu0 0
      %1379 = vmatpush1.bf16.msra.mxu0 0
      %1380 = vmatprep.subr.bf16.mxu0 0
      %1381 = vmatpush1.bf16.msra.mxu0 0
      %1382 = vmatprep.subr.bf16.mxu0 0
      %1383 = vmatpush1.bf16.msra.mxu0 0
      %1384 = vmatprep.subr.bf16.mxu0 0
      %1385 = vmatpush1.bf16.msra.mxu0 0
      %1386 = vmatprep.subr.bf16.mxu0 0
      %1387 = vmatpush1.bf16.msra.mxu0 0
      %1388 = vmatprep.subr.bf16.mxu0 0
      %1389 = vmatpush1.bf16.msra.mxu0 0
      %1390 = vmatprep.subr.bf16.mxu0 0
      %1391 = vmatpush1.bf16.msra.mxu0 0
      %1392 = vmatprep.subr.bf16.mxu0 0
      %1393 = vmatpush1.bf16.msra.mxu0 0
      %1394 = vmatprep.subr.bf16.mxu0 0
      %1395 = vmatpush1.bf16.msra.mxu0 0
      %1396 = vmatprep.subr.bf16.mxu0 0
      %1397 = vmatpush1.bf16.msra.mxu0 0
      %1398 = vmatprep.subr.bf16.mxu0 0
      %1399 = vmatpush1.bf16.msra.mxu0 0
      %1400 = vmatprep.mubr.bf16.mxu0 0
      %1401 = vmatmul.mubr.bf16.gmra.mrb[0].mxu0 %v1315
      %v1402 = vpop.f32.mrb[0].mxu0
      %v1403 = vadd.f32 0.0, %v1402
      %v1404 = vpop.f32.mrb[0].mxu0
      %v1405 = vpop.f32.mrb[0].mxu0
      %v1406 = vpop.f32.mrb[0].mxu0
      %1407 = vdwg.mxu0
      %v1409 = vsel %vm1313, %v1293, 0
      %v1412 = vsel %vm1317, %v1294, 0
      %v1415 = vsel %vm1317, %v1295, 0
      %v1418 = vsel %vm1317, %v1296, 0
      %1420 = vmatprep.subr.bf16.mxu0 %v1415
      %1421 = vmatpush1.bf16.msra.mxu0 %v1412
      %1422 = vmatprep.subr.bf16.mxu0 0
      %1423 = vmatpush1.bf16.msra.mxu0 0
      %1424 = vmatprep.subr.bf16.mxu0 0
      %1425 = vmatpush1.bf16.msra.mxu0 0
      %1426 = vmatprep.subr.bf16.mxu0 0
      %1427 = vmatpush1.bf16.msra.mxu0 0
      %1428 = vmatprep.subr.bf16.mxu0 0
      %1429 = vmatpush1.bf16.msra.mxu0 0
      %1430 = vmatprep.subr.bf16.mxu0 0
      %1431 = vmatpush1.bf16.msra.mxu0 0
      %1432 = vmatprep.subr.bf16.mxu0 0
      %1433 = vmatpush1.bf16.msra.mxu0 0
      %1434 = vmatprep.subr.bf16.mxu0 0
      %1435 = vmatpush1.bf16.msra.mxu0 0
      %1436 = vmatprep.subr.bf16.mxu0 0
      %1437 = vmatpush1.bf16.msra.mxu0 0
      %1438 = vmatprep.subr.bf16.mxu0 0
      %1439 = vmatpush1.bf16.msra.mxu0 0
      %1440 = vmatprep.subr.bf16.mxu0 0
      %1441 = vmatpush1.bf16.msra.mxu0 0
      %1442 = vmatprep.subr.bf16.mxu0 0
      %1443 = vmatpush1.bf16.msra.mxu0 0
      %1444 = vmatprep.subr.bf16.mxu0 0
      %1445 = vmatpush1.bf16.msra.mxu0 0
      %1446 = vmatprep.subr.bf16.mxu0 0
      %1447 = vmatpush1.bf16.msra.mxu0 0
      %1448 = vmatprep.subr.bf16.mxu0 0
      %1449 = vmatpush1.bf16.msra.mxu0 0
      %1450 = vmatprep.subr.bf16.mxu0 0
      %1451 = vmatpush1.bf16.msra.mxu0 0
      %1452 = vmatprep.mubr.bf16.mxu0 0
      %1453 = vmatmul.mubr.bf16.gmra.mrb[0].mxu0 %v1409
      %v1454 = vpop.f32.mrb[0].mxu0
      %v1455 = vadd.f32 %v1362, %v1454
      %v1456 = vpop.f32.mrb[0].mxu0
      %v1457 = vadd.f32 %v1364, %v1456
      %v1458 = vpop.f32.mrb[0].mxu0
      %v1459 = vpop.f32.mrb[0].mxu0
      %1460 = vdwg.mxu0
      %1461 = vmatprep.subr.bf16.mxu0 0
      %1462 = vmatpush1.bf16.msra.mxu0 %v1418
      %1463 = vmatprep.subr.bf16.mxu0 0
      %1464 = vmatpush1.bf16.msra.mxu0 0
      %1465 = vmatprep.subr.bf16.mxu0 0
      %1466 = vmatpush1.bf16.msra.mxu0 0
      %1467 = vmatprep.subr.bf16.mxu0 0
      %1468 = vmatpush1.bf16.msra.mxu0 0
      %1469 = vmatprep.subr.bf16.mxu0 0
      %1470 = vmatpush1.bf16.msra.mxu0 0
      %1471 = vmatprep.subr.bf16.mxu0 0
      %1472 = vmatpush1.bf16.msra.mxu0 0
      %1473 = vmatprep.subr.bf16.mxu0 0
      %1474 = vmatpush1.bf16.msra.mxu0 0
      %1475 = vmatprep.subr.bf16.mxu0 0
      %1476 = vmatpush1.bf16.msra.mxu0 0
      %1477 = vmatprep.subr.bf16.mxu0 0
      %1478 = vmatpush1.bf16.msra.mxu0 0
      %1479 = vmatprep.subr.bf16.mxu0 0
      %1480 = vmatpush1.bf16.msra.mxu0 0
      %1481 = vmatprep.subr.bf16.mxu0 0
      %1482 = vmatpush1.bf16.msra.mxu0 0
      %1483 = vmatprep.subr.bf16.mxu0 0
      %1484 = vmatpush1.bf16.msra.mxu0 0
      %1485 = vmatprep.subr.bf16.mxu0 0
      %1486 = vmatpush1.bf16.msra.mxu0 0
      %1487 = vmatprep.subr.bf16.mxu0 0
      %1488 = vmatpush1.bf16.msra.mxu0 0
      %1489 = vmatprep.subr.bf16.mxu0 0
      %1490 = vmatpush1.bf16.msra.mxu0 0
      %1491 = vmatprep.subr.bf16.mxu0 0
      %1492 = vmatpush1.bf16.msra.mxu0 0
      %1493 = vmatprep.mubr.bf16.mxu0 0
      %1494 = vmatmul.mubr.bf16.gmra.mrb[0].mxu0 %v1409
      %v1495 = vpop.f32.mrb[0].mxu0
      %v1496 = vadd.f32 %v1403, %v1495
      %v1497 = vpop.f32.mrb[0].mxu0
      %v1498 = vpop.f32.mrb[0].mxu0
      %v1499 = vpop.f32.mrb[0].mxu0
      %1500 = vdwg.mxu0
      %1501 = vrot.lane.b32.xlu0 %v1299, 112
      %v1502 = vpop.permute.xlu0 %1501
      %1503 = vrot.lane.b32.xlu0 %v1294, 126
      %v1504 = vpop.permute.xlu0 %1503
      %1505 = vrot.lane.b32.xlu0 %v1295, 126
      %v1506 = vpop.permute.xlu0 %1505
      %1507 = vrot.lane.b32.xlu0 %v1296, 126
      %v1508 = vpop.permute.xlu0 %1507
      %v1509 = vsel %vm455, %v1504, %v1506
      %v1510 = vsel %vm455, %v1506, %v1508
      %v1512 = vsel %vm1313, %v1502, 0
      %v1515 = vsel %vm1317, %v1509, 0
      %v1518 = vsel %vm1317, %v1510, 0
      %v1521 = vsel %vm1317, %v1508, 0
      %1523 = vmatprep.subr.bf16.mxu0 %v1518
      %1524 = vmatpush1.bf16.msra.mxu0 %v1515
      %1525 = vmatprep.subr.bf16.mxu0 0
      %1526 = vmatpush1.bf16.msra.mxu0 0
      %1527 = vmatprep.subr.bf16.mxu0 0
      %1528 = vmatpush1.bf16.msra.mxu0 0
      %1529 = vmatprep.subr.bf16.mxu0 0
      %1530 = vmatpush1.bf16.msra.mxu0 0
      %1531 = vmatprep.subr.bf16.mxu0 0
      %1532 = vmatpush1.bf16.msra.mxu0 0
      %1533 = vmatprep.subr.bf16.mxu0 0
      %1534 = vmatpush1.bf16.msra.mxu0 0
      %1535 = vmatprep.subr.bf16.mxu0 0
      %1536 = vmatpush1.bf16.msra.mxu0 0
      %1537 = vmatprep.subr.bf16.mxu0 0
      %1538 = vmatpush1.bf16.msra.mxu0 0
      %1539 = vmatprep.subr.bf16.mxu0 0
      %1540 = vmatpush1.bf16.msra.mxu0 0
      %1541 = vmatprep.subr.bf16.mxu0 0
      %1542 = vmatpush1.bf16.msra.mxu0 0
      %1543 = vmatprep.subr.bf16.mxu0 0
      %1544 = vmatpush1.bf16.msra.mxu0 0
      %1545 = vmatprep.subr.bf16.mxu0 0
      %1546 = vmatpush1.bf16.msra.mxu0 0
      %1547 = vmatprep.subr.bf16.mxu0 0
      %1548 = vmatpush1.bf16.msra.mxu0 0
      %1549 = vmatprep.subr.bf16.mxu0 0
      %1550 = vmatpush1.bf16.msra.mxu0 0
      %1551 = vmatprep.subr.bf16.mxu0 0
      %1552 = vmatpush1.bf16.msra.mxu0 0
      %1553 = vmatprep.subr.bf16.mxu0 0
      %1554 = vmatpush1.bf16.msra.mxu0 0
      %1555 = vmatprep.mubr.bf16.mxu0 0
      %1556 = vmatmul.mubr.bf16.gmra.mrb[0].mxu0 %v1512
      %v1557 = vpop.f32.mrb[0].mxu0
      %v1558 = vadd.f32 0.0, %v1557
      %v1559 = vpop.f32.mrb[0].mxu0
      %v1560 = vadd.f32 0.0, %v1559
      %v1561 = vpop.f32.mrb[0].mxu0
      %v1562 = vpop.f32.mrb[0].mxu0
      %1563 = vdwg.mxu0
      %1564 = vmatprep.subr.bf16.mxu0 0
      %1565 = vmatpush1.bf16.msra.mxu0 %v1521
      %1566 = vmatprep.subr.bf16.mxu0 0
      %1567 = vmatpush1.bf16.msra.mxu0 0
      %1568 = vmatprep.subr.bf16.mxu0 0
      %1569 = vmatpush1.bf16.msra.mxu0 0
      %1570 = vmatprep.subr.bf16.mxu0 0
      %1571 = vmatpush1.bf16.msra.mxu0 0
      %1572 = vmatprep.subr.bf16.mxu0 0
      %1573 = vmatpush1.bf16.msra.mxu0 0
      %1574 = vmatprep.subr.bf16.mxu0 0
      %1575 = vmatpush1.bf16.msra.mxu0 0
      %1576 = vmatprep.subr.bf16.mxu0 0
      %1577 = vmatpush1.bf16.msra.mxu0 0
      %1578 = vmatprep.subr.bf16.mxu0 0
      %1579 = vmatpush1.bf16.msra.mxu0 0
      %1580 = vmatprep.subr.bf16.mxu0 0
      %1581 = vmatpush1.bf16.msra.mxu0 0
      %1582 = vmatprep.subr.bf16.mxu0 0
      %1583 = vmatpush1.bf16.msra.mxu0 0
      %1584 = vmatprep.subr.bf16.mxu0 0
      %1585 = vmatpush1.bf16.msra.mxu0 0
      %1586 = vmatprep.subr.bf16.mxu0 0
      %1587 = vmatpush1.bf16.msra.mxu0 0
      %1588 = vmatprep.subr.bf16.mxu0 0
      %1589 = vmatpush1.bf16.msra.mxu0 0
      %1590 = vmatprep.subr.bf16.mxu0 0
      %1591 = vmatpush1.bf16.msra.mxu0 0
      %1592 = vmatprep.subr.bf16.mxu0 0
      %1593 = vmatpush1.bf16.msra.mxu0 0
      %1594 = vmatprep.subr.bf16.mxu0 0
      %1595 = vmatpush1.bf16.msra.mxu0 0
      %1596 = vmatprep.mubr.bf16.mxu0 0
      %1597 = vmatmul.mubr.bf16.gmra.mrb[0].mxu0 %v1512
      %v1598 = vpop.f32.mrb[0].mxu0
      %v1599 = vadd.f32 0.0, %v1598
      %v1600 = vpop.f32.mrb[0].mxu0
      %v1601 = vpop.f32.mrb[0].mxu0
      %v1602 = vpop.f32.mrb[0].mxu0
      %1603 = vdwg.mxu0
      %v1604 = vadd.f32 %v1455, %v1558
      %v1605 = vadd.f32 %v1457, %v1560
      %v1606 = vadd.f32 %v1496, %v1599
      %1607 = vrot.lane.b32.xlu0 %v1299, 104
      %v1608 = vpop.permute.xlu0 %1607
      %1609 = vrot.lane.b32.xlu0 %v1294, 110
      %v1610 = vpop.permute.xlu0 %1609
      %1611 = vrot.lane.b32.xlu0 %v1295, 110
      %v1612 = vpop.permute.xlu0 %1611
      %1613 = vrot.lane.b32.xlu0 %v1296, 110
      %v1614 = vpop.permute.xlu0 %1613
      %v1615 = vsel %vm562, %v1610, %v1612
      %v1616 = vsel %vm562, %v1612, %v1614
      %v1618 = vsel %vm1313, %v1608, 0
      %v1621 = vsel %vm1317, %v1615, 0
      %v1624 = vsel %vm1317, %v1616, 0
      %v1627 = vsel %vm1317, %v1614, 0
      %1629 = vmatprep.subr.bf16.mxu0 %v1624
      %1630 = vmatpush1.bf16.msra.mxu0 %v1621
      %1631 = vmatprep.subr.bf16.mxu0 0
      %1632 = vmatpush1.bf16.msra.mxu0 0
      %1633 = vmatprep.subr.bf16.mxu0 0
      %1634 = vmatpush1.bf16.msra.mxu0 0
      %1635 = vmatprep.subr.bf16.mxu0 0
      %1636 = vmatpush1.bf16.msra.mxu0 0
      %1637 = vmatprep.subr.bf16.mxu0 0
      %1638 = vmatpush1.bf16.msra.mxu0 0
      %1639 = vmatprep.subr.bf16.mxu0 0
      %1640 = vmatpush1.bf16.msra.mxu0 0
      %1641 = vmatprep.subr.bf16.mxu0 0
      %1642 = vmatpush1.bf16.msra.mxu0 0
      %1643 = vmatprep.subr.bf16.mxu0 0
      %1644 = vmatpush1.bf16.msra.mxu0 0
      %1645 = vmatprep.subr.bf16.mxu0 0
      %1646 = vmatpush1.bf16.msra.mxu0 0
      %1647 = vmatprep.subr.bf16.mxu0 0
      %1648 = vmatpush1.bf16.msra.mxu0 0
      %1649 = vmatprep.subr.bf16.mxu0 0
      %1650 = vmatpush1.bf16.msra.mxu0 0
      %1651 = vmatprep.subr.bf16.mxu0 0
      %1652 = vmatpush1.bf16.msra.mxu0 0
      %1653 = vmatprep.subr.bf16.mxu0 0
      %1654 = vmatpush1.bf16.msra.mxu0 0
      %1655 = vmatprep.subr.bf16.mxu0 0
      %1656 = vmatpush1.bf16.msra.mxu0 0
      %1657 = vmatprep.subr.bf16.mxu0 0
      %1658 = vmatpush1.bf16.msra.mxu0 0
      %1659 = vmatprep.subr.bf16.mxu0 0
      %1660 = vmatpush1.bf16.msra.mxu0 0
      %1661 = vmatprep.mubr.bf16.mxu0 0
      %1662 = vmatmul.mubr.bf16.gmra.mrb[0].mxu0 %v1618
      %v1663 = vpop.f32.mrb[0].mxu0
      %v1664 = vadd.f32 0.0, %v1663
      %v1665 = vpop.f32.mrb[0].mxu0
      %v1666 = vadd.f32 0.0, %v1665
      %v1667 = vpop.f32.mrb[0].mxu0
      %v1668 = vpop.f32.mrb[0].mxu0
      %1669 = vdwg.mxu0
      %1670 = vmatprep.subr.bf16.mxu0 0
      %1671 = vmatpush1.bf16.msra.mxu0 %v1627
      %1672 = vmatprep.subr.bf16.mxu0 0
      %1673 = vmatpush1.bf16.msra.mxu0 0
      %1674 = vmatprep.subr.bf16.mxu0 0
      %1675 = vmatpush1.bf16.msra.mxu0 0
      %1676 = vmatprep.subr.bf16.mxu0 0
      %1677 = vmatpush1.bf16.msra.mxu0 0
      %1678 = vmatprep.subr.bf16.mxu0 0
      %1679 = vmatpush1.bf16.msra.mxu0 0
      %1680 = vmatprep.subr.bf16.mxu0 0
      %1681 = vmatpush1.bf16.msra.mxu0 0
      %1682 = vmatprep.subr.bf16.mxu0 0
      %1683 = vmatpush1.bf16.msra.mxu0 0
      %1684 = vmatprep.subr.bf16.mxu0 0
      %1685 = vmatpush1.bf16.msra.mxu0 0
      %1686 = vmatprep.subr.bf16.mxu0 0
      %1687 = vmatpush1.bf16.msra.mxu0 0
      %1688 = vmatprep.subr.bf16.mxu0 0
      %1689 = vmatpush1.bf16.msra.mxu0 0
      %1690 = vmatprep.subr.bf16.mxu0 0
      %1691 = vmatpush1.bf16.msra.mxu0 0
      %1692 = vmatprep.subr.bf16.mxu0 0
      %1693 = vmatpush1.bf16.msra.mxu0 0
      %1694 = vmatprep.subr.bf16.mxu0 0
      %1695 = vmatpush1.bf16.msra.mxu0 0
      %1696 = vmatprep.subr.bf16.mxu0 0
      %1697 = vmatpush1.bf16.msra.mxu0 0
      %1698 = vmatprep.subr.bf16.mxu0 0
      %1699 = vmatpush1.bf16.msra.mxu0 0
      %1700 = vmatprep.subr.bf16.mxu0 0
      %1701 = vmatpush1.bf16.msra.mxu0 0
      %1702 = vmatprep.mubr.bf16.mxu0 0
      %1703 = vmatmul.mubr.bf16.gmra.mrb[0].mxu0 %v1618
      %v1704 = vpop.f32.mrb[0].mxu0
      %v1705 = vadd.f32 0.0, %v1704
      %v1706 = vpop.f32.mrb[0].mxu0
      %v1707 = vpop.f32.mrb[0].mxu0
      %v1708 = vpop.f32.mrb[0].mxu0
      %1709 = vdwg.mxu0
      %v1710 = vadd.f32 %v1604, %v1664
      %v1711 = vadd.f32 %v1605, %v1666
      %v1712 = vadd.f32 %v1606, %v1705
      %1713 = vrot.lane.b32.xlu0 %v1299, 96
      %v1714 = vpop.permute.xlu0 %1713
      %1715 = vrot.lane.b32.xlu0 %v1294, 109
      %v1716 = vpop.permute.xlu0 %1715
      %1717 = vrot.lane.b32.xlu0 %v1295, 109
      %v1718 = vpop.permute.xlu0 %1717
      %1719 = vrot.lane.b32.xlu0 %v1296, 109
      %v1720 = vpop.permute.xlu0 %1719
      %v1721 = vsel %vm669, %v1716, %v1718
      %v1722 = vsel %vm669, %v1718, %v1720
      %v1724 = vsel %vm1313, %v1714, 0
      %v1727 = vsel %vm1317, %v1721, 0
      %v1730 = vsel %vm1317, %v1722, 0
      %v1733 = vsel %vm1317, %v1720, 0
      %1735 = vmatprep.subr.bf16.mxu0 %v1730
      %1736 = vmatpush1.bf16.msra.mxu0 %v1727
      %1737 = vmatprep.subr.bf16.mxu0 0
      %1738 = vmatpush1.bf16.msra.mxu0 0
      %1739 = vmatprep.subr.bf16.mxu0 0
      %1740 = vmatpush1.bf16.msra.mxu0 0
      %1741 = vmatprep.subr.bf16.mxu0 0
      %1742 = vmatpush1.bf16.msra.mxu0 0
      %1743 = vmatprep.subr.bf16.mxu0 0
      %1744 = vmatpush1.bf16.msra.mxu0 0
      %1745 = vmatprep.subr.bf16.mxu0 0
      %1746 = vmatpush1.bf16.msra.mxu0 0
      %1747 = vmatprep.subr.bf16.mxu0 0
      %1748 = vmatpush1.bf16.msra.mxu0 0
      %1749 = vmatprep.subr.bf16.mxu0 0
      %1750 = vmatpush1.bf16.msra.mxu0 0
      %1751 = vmatprep.subr.bf16.mxu0 0
      %1752 = vmatpush1.bf16.msra.mxu0 0
      %1753 = vmatprep.subr.bf16.mxu0 0
      %1754 = vmatpush1.bf16.msra.mxu0 0
      %1755 = vmatprep.subr.bf16.mxu0 0
      %1756 = vmatpush1.bf16.msra.mxu0 0
      %1757 = vmatprep.subr.bf16.mxu0 0
      %1758 = vmatpush1.bf16.msra.mxu0 0
      %1759 = vmatprep.subr.bf16.mxu0 0
      %1760 = vmatpush1.bf16.msra.mxu0 0
      %1761 = vmatprep.subr.bf16.mxu0 0
      %1762 = vmatpush1.bf16.msra.mxu0 0
      %1763 = vmatprep.subr.bf16.mxu0 0
      %1764 = vmatpush1.bf16.msra.mxu0 0
      %1765 = vmatprep.subr.bf16.mxu0 0
      %1766 = vmatpush1.bf16.msra.mxu0 0
      %1767 = vmatprep.mubr.bf16.mxu0 0
      %1768 = vmatmul.mubr.bf16.gmra.mrb[0].mxu0 %v1724
      %v1769 = vpop.f32.mrb[0].mxu0
      %v1770 = vadd.f32 0.0, %v1769
      %v1771 = vpop.f32.mrb[0].mxu0
      %v1772 = vadd.f32 0.0, %v1771
      %v1773 = vpop.f32.mrb[0].mxu0
      %v1774 = vpop.f32.mrb[0].mxu0
      %1775 = vdwg.mxu0
      %1776 = vmatprep.subr.bf16.mxu0 0
      %1777 = vmatpush1.bf16.msra.mxu0 %v1733
      %1778 = vmatprep.subr.bf16.mxu0 0
      %1779 = vmatpush1.bf16.msra.mxu0 0
      %1780 = vmatprep.subr.bf16.mxu0 0
      %1781 = vmatpush1.bf16.msra.mxu0 0
      %1782 = vmatprep.subr.bf16.mxu0 0
      %1783 = vmatpush1.bf16.msra.mxu0 0
      %1784 = vmatprep.subr.bf16.mxu0 0
      %1785 = vmatpush1.bf16.msra.mxu0 0
      %1786 = vmatprep.subr.bf16.mxu0 0
      %1787 = vmatpush1.bf16.msra.mxu0 0
      %1788 = vmatprep.subr.bf16.mxu0 0
      %1789 = vmatpush1.bf16.msra.mxu0 0
      %1790 = vmatprep.subr.bf16.mxu0 0
      %1791 = vmatpush1.bf16.msra.mxu0 0
      %1792 = vmatprep.subr.bf16.mxu0 0
      %1793 = vmatpush1.bf16.msra.mxu0 0
      %1794 = vmatprep.subr.bf16.mxu0 0
      %1795 = vmatpush1.bf16.msra.mxu0 0
      %1796 = vmatprep.subr.bf16.mxu0 0
      %1797 = vmatpush1.bf16.msra.mxu0 0
      %1798 = vmatprep.subr.bf16.mxu0 0
      %1799 = vmatpush1.bf16.msra.mxu0 0
      %1800 = vmatprep.subr.bf16.mxu0 0
      %1801 = vmatpush1.bf16.msra.mxu0 0
      %1802 = vmatprep.subr.bf16.mxu0 0
      %1803 = vmatpush1.bf16.msra.mxu0 0
      %1804 = vmatprep.subr.bf16.mxu0 0
      %1805 = vmatpush1.bf16.msra.mxu0 0
      %1806 = vmatprep.subr.bf16.mxu0 0
      %1807 = vmatpush1.bf16.msra.mxu0 0
      %1808 = vmatprep.mubr.bf16.mxu0 0
      %1809 = vmatmul.mubr.bf16.gmra.mrb[0].mxu0 %v1724
      %v1810 = vpop.f32.mrb[0].mxu0
      %v1811 = vadd.f32 0.0, %v1810
      %v1812 = vpop.f32.mrb[0].mxu0
      %v1813 = vpop.f32.mrb[0].mxu0
      %v1814 = vpop.f32.mrb[0].mxu0
      %1815 = vdwg.mxu0
      %v1816 = vadd.f32 %v1710, %v1770
      %v1817 = vadd.f32 %v1711, %v1772
      %v1818 = vadd.f32 %v1712, %v1811
      %1819 = vrot.lane.b32.xlu0 %v1299, 88
      %v1820 = vpop.permute.xlu0 %1819
      %1821 = vrot.lane.b32.xlu0 %v1294, 108
      %v1822 = vpop.permute.xlu0 %1821
      %1823 = vrot.lane.b32.xlu0 %v1295, 108
      %v1824 = vpop.permute.xlu0 %1823
      %1825 = vrot.lane.b32.xlu0 %v1296, 108
      %v1826 = vpop.permute.xlu0 %1825
      %v1827 = vsel %vm776, %v1822, %v1824
      %v1828 = vsel %vm776, %v1824, %v1826
      %v1830 = vsel %vm1313, %v1820, 0
      %v1833 = vsel %vm1317, %v1827, 0
      %v1836 = vsel %vm1317, %v1828, 0
      %v1839 = vsel %vm1317, %v1826, 0
      %1841 = vmatprep.subr.bf16.mxu0 %v1836
      %1842 = vmatpush1.bf16.msra.mxu0 %v1833
      %1843 = vmatprep.subr.bf16.mxu0 0
      %1844 = vmatpush1.bf16.msra.mxu0 0
      %1845 = vmatprep.subr.bf16.mxu0 0
      %1846 = vmatpush1.bf16.msra.mxu0 0
      %1847 = vmatprep.subr.bf16.mxu0 0
      %1848 = vmatpush1.bf16.msra.mxu0 0
      %1849 = vmatprep.subr.bf16.mxu0 0
      %1850 = vmatpush1.bf16.msra.mxu0 0
      %1851 = vmatprep.subr.bf16.mxu0 0
      %1852 = vmatpush1.bf16.msra.mxu0 0
      %1853 = vmatprep.subr.bf16.mxu0 0
      %1854 = vmatpush1.bf16.msra.mxu0 0
      %1855 = vmatprep.subr.bf16.mxu0 0
      %1856 = vmatpush1.bf16.msra.mxu0 0
      %1857 = vmatprep.subr.bf16.mxu0 0
      %1858 = vmatpush1.bf16.msra.mxu0 0
      %1859 = vmatprep.subr.bf16.mxu0 0
      %1860 = vmatpush1.bf16.msra.mxu0 0
      %1861 = vmatprep.subr.bf16.mxu0 0
      %1862 = vmatpush1.bf16.msra.mxu0 0
      %1863 = vmatprep.subr.bf16.mxu0 0
      %1864 = vmatpush1.bf16.msra.mxu0 0
      %1865 = vmatprep.subr.bf16.mxu0 0
      %1866 = vmatpush1.bf16.msra.mxu0 0
      %1867 = vmatprep.subr.bf16.mxu0 0
      %1868 = vmatpush1.bf16.msra.mxu0 0
      %1869 = vmatprep.subr.bf16.mxu0 0
      %1870 = vmatpush1.bf16.msra.mxu0 0
      %1871 = vmatprep.subr.bf16.mxu0 0
      %1872 = vmatpush1.bf16.msra.mxu0 0
      %1873 = vmatprep.mubr.bf16.mxu0 0
      %1874 = vmatmul.mubr.bf16.gmra.mrb[0].mxu0 %v1830
      %v1875 = vpop.f32.mrb[0].mxu0
      %v1876 = vadd.f32 0.0, %v1875
      %v1877 = vpop.f32.mrb[0].mxu0
      %v1878 = vadd.f32 0.0, %v1877
      %v1879 = vpop.f32.mrb[0].mxu0
      %v1880 = vpop.f32.mrb[0].mxu0
      %1881 = vdwg.mxu0
      %1882 = vmatprep.subr.bf16.mxu0 0
      %1883 = vmatpush1.bf16.msra.mxu0 %v1839
      %1884 = vmatprep.subr.bf16.mxu0 0
      %1885 = vmatpush1.bf16.msra.mxu0 0
      %1886 = vmatprep.subr.bf16.mxu0 0
      %1887 = vmatpush1.bf16.msra.mxu0 0
      %1888 = vmatprep.subr.bf16.mxu0 0
      %1889 = vmatpush1.bf16.msra.mxu0 0
      %1890 = vmatprep.subr.bf16.mxu0 0
      %1891 = vmatpush1.bf16.msra.mxu0 0
      %1892 = vmatprep.subr.bf16.mxu0 0
      %1893 = vmatpush1.bf16.msra.mxu0 0
      %1894 = vmatprep.subr.bf16.mxu0 0
      %1895 = vmatpush1.bf16.msra.mxu0 0
      %1896 = vmatprep.subr.bf16.mxu0 0
      %1897 = vmatpush1.bf16.msra.mxu0 0
      %1898 = vmatprep.subr.bf16.mxu0 0
      %1899 = vmatpush1.bf16.msra.mxu0 0
      %1900 = vmatprep.subr.bf16.mxu0 0
      %1901 = vmatpush1.bf16.msra.mxu0 0
      %1902 = vmatprep.subr.bf16.mxu0 0
      %1903 = vmatpush1.bf16.msra.mxu0 0
      %1904 = vmatprep.subr.bf16.mxu0 0
      %1905 = vmatpush1.bf16.msra.mxu0 0
      %1906 = vmatprep.subr.bf16.mxu0 0
      %1907 = vmatpush1.bf16.msra.mxu0 0
      %1908 = vmatprep.subr.bf16.mxu0 0
      %1909 = vmatpush1.bf16.msra.mxu0 0
      %1910 = vmatprep.subr.bf16.mxu0 0
      %1911 = vmatpush1.bf16.msra.mxu0 0
      %1912 = vmatprep.subr.bf16.mxu0 0
      %1913 = vmatpush1.bf16.msra.mxu0 0
      %1914 = vmatprep.mubr.bf16.mxu0 0
      %1915 = vmatmul.mubr.bf16.gmra.mrb[0].mxu0 %v1830
      %v1916 = vpop.f32.mrb[0].mxu0
      %v1917 = vadd.f32 0.0, %v1916
      %v1918 = vpop.f32.mrb[0].mxu0
      %v1919 = vpop.f32.mrb[0].mxu0
      %v1920 = vpop.f32.mrb[0].mxu0
      %1921 = vdwg.mxu0
      %v1922 = vadd.f32 %v1816, %v1876
      %v1923 = vadd.f32 %v1817, %v1878
      %v1924 = vadd.f32 %v1818, %v1917
      %1925 = vrot.lane.b32.xlu0 %v1299, 80
      %v1926 = vpop.permute.xlu0 %1925
      %1927 = vrot.lane.b32.xlu0 %v1294, 92
      %v1928 = vpop.permute.xlu0 %1927
      %1929 = vrot.lane.b32.xlu0 %v1295, 92
      %v1930 = vpop.permute.xlu0 %1929
      %1931 = vrot.lane.b32.xlu0 %v1296, 92
      %v1932 = vpop.permute.xlu0 %1931
      %v1933 = vsel %vm883, %v1928, %v1930
      %v1934 = vsel %vm883, %v1930, %v1932
      %v1936 = vsel %vm1313, %v1926, 0
      %v1939 = vsel %vm1317, %v1933, 0
      %v1942 = vsel %vm1317, %v1934, 0
      %v1945 = vsel %vm1317, %v1932, 0
      %1947 = vmatprep.subr.bf16.mxu0 %v1942
      %1948 = vmatpush1.bf16.msra.mxu0 %v1939
      %1949 = vmatprep.subr.bf16.mxu0 0
      %1950 = vmatpush1.bf16.msra.mxu0 0
      %1951 = vmatprep.subr.bf16.mxu0 0
      %1952 = vmatpush1.bf16.msra.mxu0 0
      %1953 = vmatprep.subr.bf16.mxu0 0
      %1954 = vmatpush1.bf16.msra.mxu0 0
      %1955 = vmatprep.subr.bf16.mxu0 0
      %1956 = vmatpush1.bf16.msra.mxu0 0
      %1957 = vmatprep.subr.bf16.mxu0 0
      %1958 = vmatpush1.bf16.msra.mxu0 0
      %1959 = vmatprep.subr.bf16.mxu0 0
      %1960 = vmatpush1.bf16.msra.mxu0 0
      %1961 = vmatprep.subr.bf16.mxu0 0
      %1962 = vmatpush1.bf16.msra.mxu0 0
      %1963 = vmatprep.subr.bf16.mxu0 0
      %1964 = vmatpush1.bf16.msra.mxu0 0
      %1965 = vmatprep.subr.bf16.mxu0 0
      %1966 = vmatpush1.bf16.msra.mxu0 0
      %1967 = vmatprep.subr.bf16.mxu0 0
      %1968 = vmatpush1.bf16.msra.mxu0 0
      %1969 = vmatprep.subr.bf16.mxu0 0
      %1970 = vmatpush1.bf16.msra.mxu0 0
      %1971 = vmatprep.subr.bf16.mxu0 0
      %1972 = vmatpush1.bf16.msra.mxu0 0
      %1973 = vmatprep.subr.bf16.mxu0 0
      %1974 = vmatpush1.bf16.msra.mxu0 0
      %1975 = vmatprep.subr.bf16.mxu0 0
      %1976 = vmatpush1.bf16.msra.mxu0 0
      %1977 = vmatprep.subr.bf16.mxu0 0
      %1978 = vmatpush1.bf16.msra.mxu0 0
      %1979 = vmatprep.mubr.bf16.mxu0 0
      %1980 = vmatmul.mubr.bf16.gmra.mrb[0].mxu0 %v1936
      %v1981 = vpop.f32.mrb[0].mxu0
      %v1982 = vadd.f32 0.0, %v1981
      %v1983 = vpop.f32.mrb[0].mxu0
      %v1984 = vadd.f32 0.0, %v1983
      %v1985 = vpop.f32.mrb[0].mxu0
      %v1986 = vpop.f32.mrb[0].mxu0
      %1987 = vdwg.mxu0
      %1988 = vmatprep.subr.bf16.mxu0 0
      %1989 = vmatpush1.bf16.msra.mxu0 %v1945
      %1990 = vmatprep.subr.bf16.mxu0 0
      %1991 = vmatpush1.bf16.msra.mxu0 0
      %1992 = vmatprep.subr.bf16.mxu0 0
      %1993 = vmatpush1.bf16.msra.mxu0 0
      %1994 = vmatprep.subr.bf16.mxu0 0
      %1995 = vmatpush1.bf16.msra.mxu0 0
      %1996 = vmatprep.subr.bf16.mxu0 0
      %1997 = vmatpush1.bf16.msra.mxu0 0
      %1998 = vmatprep.subr.bf16.mxu0 0
      %1999 = vmatpush1.bf16.msra.mxu0 0
      %2000 = vmatprep.subr.bf16.mxu0 0
      %2001 = vmatpush1.bf16.msra.mxu0 0
      %2002 = vmatprep.subr.bf16.mxu0 0
      %2003 = vmatpush1.bf16.msra.mxu0 0
      %2004 = vmatprep.subr.bf16.mxu0 0
      %2005 = vmatpush1.bf16.msra.mxu0 0
      %2006 = vmatprep.subr.bf16.mxu0 0
      %2007 = vmatpush1.bf16.msra.mxu0 0
      %2008 = vmatprep.subr.bf16.mxu0 0
      %2009 = vmatpush1.bf16.msra.mxu0 0
      %2010 = vmatprep.subr.bf16.mxu0 0
      %2011 = vmatpush1.bf16.msra.mxu0 0
      %2012 = vmatprep.subr.bf16.mxu0 0
      %2013 = vmatpush1.bf16.msra.mxu0 0
      %2014 = vmatprep.subr.bf16.mxu0 0
      %2015 = vmatpush1.bf16.msra.mxu0 0
      %2016 = vmatprep.subr.bf16.mxu0 0
      %2017 = vmatpush1.bf16.msra.mxu0 0
      %2018 = vmatprep.subr.bf16.mxu0 0
      %2019 = vmatpush1.bf16.msra.mxu0 0
      %2020 = vmatprep.mubr.bf16.mxu0 0
      %2021 = vmatmul.mubr.bf16.gmra.mrb[0].mxu0 %v1936
      %v2022 = vpop.f32.mrb[0].mxu0
      %v2023 = vadd.f32 0.0, %v2022
      %v2024 = vpop.f32.mrb[0].mxu0
      %v2025 = vpop.f32.mrb[0].mxu0
      %v2026 = vpop.f32.mrb[0].mxu0
      %2027 = vdwg.mxu0
      %v2028 = vadd.f32 %v1922, %v1982
      %v2029 = vadd.f32 %v1923, %v1984
      %v2030 = vadd.f32 %v1924, %v2023
      %2031 = vrot.lane.b32.xlu0 %v1299, 72
      %v2032 = vpop.permute.xlu0 %2031
      %2033 = vrot.lane.b32.xlu0 %v1294, 91
      %v2034 = vpop.permute.xlu0 %2033
      %2035 = vrot.lane.b32.xlu0 %v1295, 91
      %v2036 = vpop.permute.xlu0 %2035
      %2037 = vrot.lane.b32.xlu0 %v1296, 91
      %v2038 = vpop.permute.xlu0 %2037
      %v2039 = vsel %vm990, %v2034, %v2036
      %v2040 = vsel %vm990, %v2036, %v2038
      %v2042 = vsel %vm1313, %v2032, 0
      %v2045 = vsel %vm1317, %v2039, 0
      %v2048 = vsel %vm1317, %v2040, 0
      %v2051 = vsel %vm1317, %v2038, 0
      %2053 = vmatprep.subr.bf16.mxu0 %v2048
      %2054 = vmatpush1.bf16.msra.mxu0 %v2045
      %2055 = vmatprep.subr.bf16.mxu0 0
      %2056 = vmatpush1.bf16.msra.mxu0 0
      %2057 = vmatprep.subr.bf16.mxu0 0
      %2058 = vmatpush1.bf16.msra.mxu0 0
      %2059 = vmatprep.subr.bf16.mxu0 0
      %2060 = vmatpush1.bf16.msra.mxu0 0
      %2061 = vmatprep.subr.bf16.mxu0 0
      %2062 = vmatpush1.bf16.msra.mxu0 0
      %2063 = vmatprep.subr.bf16.mxu0 0
      %2064 = vmatpush1.bf16.msra.mxu0 0
      %2065 = vmatprep.subr.bf16.mxu0 0
      %2066 = vmatpush1.bf16.msra.mxu0 0
      %2067 = vmatprep.subr.bf16.mxu0 0
      %2068 = vmatpush1.bf16.msra.mxu0 0
      %2069 = vmatprep.subr.bf16.mxu0 0
      %2070 = vmatpush1.bf16.msra.mxu0 0
      %2071 = vmatprep.subr.bf16.mxu0 0
      %2072 = vmatpush1.bf16.msra.mxu0 0
      %2073 = vmatprep.subr.bf16.mxu0 0
      %2074 = vmatpush1.bf16.msra.mxu0 0
      %2075 = vmatprep.subr.bf16.mxu0 0
      %2076 = vmatpush1.bf16.msra.mxu0 0
      %2077 = vmatprep.subr.bf16.mxu0 0
      %2078 = vmatpush1.bf16.msra.mxu0 0
      %2079 = vmatprep.subr.bf16.mxu0 0
      %2080 = vmatpush1.bf16.msra.mxu0 0
      %2081 = vmatprep.subr.bf16.mxu0 0
      %2082 = vmatpush1.bf16.msra.mxu0 0
      %2083 = vmatprep.subr.bf16.mxu0 0
      %2084 = vmatpush1.bf16.msra.mxu0 0
      %2085 = vmatprep.mubr.bf16.mxu0 0
      %2086 = vmatmul.mubr.bf16.gmra.mrb[0].mxu0 %v2042
      %v2087 = vpop.f32.mrb[0].mxu0
      %v2088 = vadd.f32 0.0, %v2087
      %v2089 = vpop.f32.mrb[0].mxu0
      %v2090 = vadd.f32 0.0, %v2089
      %v2091 = vpop.f32.mrb[0].mxu0
      %v2092 = vpop.f32.mrb[0].mxu0
      %2093 = vdwg.mxu0
      %2094 = vmatprep.subr.bf16.mxu0 0
      %2095 = vmatpush1.bf16.msra.mxu0 %v2051
      %2096 = vmatprep.subr.bf16.mxu0 0
      %2097 = vmatpush1.bf16.msra.mxu0 0
      %2098 = vmatprep.subr.bf16.mxu0 0
      %2099 = vmatpush1.bf16.msra.mxu0 0
      %2100 = vmatprep.subr.bf16.mxu0 0
      %2101 = vmatpush1.bf16.msra.mxu0 0
      %2102 = vmatprep.subr.bf16.mxu0 0
      %2103 = vmatpush1.bf16.msra.mxu0 0
      %2104 = vmatprep.subr.bf16.mxu0 0
      %2105 = vmatpush1.bf16.msra.mxu0 0
      %2106 = vmatprep.subr.bf16.mxu0 0
      %2107 = vmatpush1.bf16.msra.mxu0 0
      %2108 = vmatprep.subr.bf16.mxu0 0
      %2109 = vmatpush1.bf16.msra.mxu0 0
      %2110 = vmatprep.subr.bf16.mxu0 0
      %2111 = vmatpush1.bf16.msra.mxu0 0
      %2112 = vmatprep.subr.bf16.mxu0 0
      %2113 = vmatpush1.bf16.msra.mxu0 0
      %2114 = vmatprep.subr.bf16.mxu0 0
      %2115 = vmatpush1.bf16.msra.mxu0 0
      %2116 = vmatprep.subr.bf16.mxu0 0
      %2117 = vmatpush1.bf16.msra.mxu0 0
      %2118 = vmatprep.subr.bf16.mxu0 0
      %2119 = vmatpush1.bf16.msra.mxu0 0
      %2120 = vmatprep.subr.bf16.mxu0 0
      %2121 = vmatpush1.bf16.msra.mxu0 0
      %2122 = vmatprep.subr.bf16.mxu0 0
      %2123 = vmatpush1.bf16.msra.mxu0 0
      %2124 = vmatprep.subr.bf16.mxu0 0
      %2125 = vmatpush1.bf16.msra.mxu0 0
      %2126 = vmatprep.mubr.bf16.mxu0 0
      %2127 = vmatmul.mubr.bf16.gmra.mrb[0].mxu0 %v2042
      %v2128 = vpop.f32.mrb[0].mxu0
      %v2129 = vadd.f32 0.0, %v2128
      %v2130 = vpop.f32.mrb[0].mxu0
      %v2131 = vpop.f32.mrb[0].mxu0
      %v2132 = vpop.f32.mrb[0].mxu0
      %2133 = vdwg.mxu0
      %v2134 = vadd.f32 %v2028, %v2088
      %v2135 = vadd.f32 %v2029, %v2090
      %v2136 = vadd.f32 %v2030, %v2129
      %2137 = vrot.lane.b32.xlu0 %v1299, 64
      %v2138 = vpop.permute.xlu0 %2137
      %2139 = vrot.lane.b32.xlu0 %v1294, 90
      %v2140 = vpop.permute.xlu0 %2139
      %2141 = vrot.lane.b32.xlu0 %v1295, 90
      %v2142 = vpop.permute.xlu0 %2141
      %2143 = vrot.lane.b32.xlu0 %v1296, 90
      %v2144 = vpop.permute.xlu0 %2143
      %v2145 = vsel %vm1097, %v2140, %v2142
      %v2146 = vsel %vm1097, %v2142, %v2144
      %v2148 = vsel %vm1313, %v2138, 0
      %v2151 = vsel %vm1317, %v2145, 0
      %v2154 = vsel %vm1317, %v2146, 0
      %v2157 = vsel %vm1317, %v2144, 0
      %2159 = vmatprep.subr.bf16.mxu0 %v2154
      %2160 = vmatpush1.bf16.msra.mxu0 %v2151
      %2161 = vmatprep.subr.bf16.mxu0 0
      %2162 = vmatpush1.bf16.msra.mxu0 0
      %2163 = vmatprep.subr.bf16.mxu0 0
      %2164 = vmatpush1.bf16.msra.mxu0 0
      %2165 = vmatprep.subr.bf16.mxu0 0
      %2166 = vmatpush1.bf16.msra.mxu0 0
      %2167 = vmatprep.subr.bf16.mxu0 0
      %2168 = vmatpush1.bf16.msra.mxu0 0
      %2169 = vmatprep.subr.bf16.mxu0 0
      %2170 = vmatpush1.bf16.msra.mxu0 0
      %2171 = vmatprep.subr.bf16.mxu0 0
      %2172 = vmatpush1.bf16.msra.mxu0 0
      %2173 = vmatprep.subr.bf16.mxu0 0
      %2174 = vmatpush1.bf16.msra.mxu0 0
      %2175 = vmatprep.subr.bf16.mxu0 0
      %2176 = vmatpush1.bf16.msra.mxu0 0
      %2177 = vmatprep.subr.bf16.mxu0 0
      %2178 = vmatpush1.bf16.msra.mxu0 0
      %2179 = vmatprep.subr.bf16.mxu0 0
      %2180 = vmatpush1.bf16.msra.mxu0 0
      %2181 = vmatprep.subr.bf16.mxu0 0
      %2182 = vmatpush1.bf16.msra.mxu0 0
      %2183 = vmatprep.subr.bf16.mxu0 0
      %2184 = vmatpush1.bf16.msra.mxu0 0
      %2185 = vmatprep.subr.bf16.mxu0 0
      %2186 = vmatpush1.bf16.msra.mxu0 0
      %2187 = vmatprep.subr.bf16.mxu0 0
      %2188 = vmatpush1.bf16.msra.mxu0 0
      %2189 = vmatprep.subr.bf16.mxu0 0
      %2190 = vmatpush1.bf16.msra.mxu0 0
      %2191 = vmatprep.mubr.bf16.mxu0 0
      %2192 = vmatmul.mubr.bf16.gmra.mrb[0].mxu0 %v2148
      %v2193 = vpop.f32.mrb[0].mxu0
      %v2194 = vadd.f32 0.0, %v2193
      %v2195 = vpop.f32.mrb[0].mxu0
      %v2196 = vadd.f32 0.0, %v2195
      %v2197 = vpop.f32.mrb[0].mxu0
      %v2198 = vpop.f32.mrb[0].mxu0
      %2199 = vdwg.mxu0
      %2200 = vmatprep.subr.bf16.mxu0 0
      %2201 = vmatpush1.bf16.msra.mxu0 %v2157
      %2202 = vmatprep.subr.bf16.mxu0 0
      %2203 = vmatpush1.bf16.msra.mxu0 0
      %2204 = vmatprep.subr.bf16.mxu0 0
      %2205 = vmatpush1.bf16.msra.mxu0 0
      %2206 = vmatprep.subr.bf16.mxu0 0
      %2207 = vmatpush1.bf16.msra.mxu0 0
      %2208 = vmatprep.subr.bf16.mxu0 0
      %2209 = vmatpush1.bf16.msra.mxu0 0
      %2210 = vmatprep.subr.bf16.mxu0 0
      %2211 = vmatpush1.bf16.msra.mxu0 0
      %2212 = vmatprep.subr.bf16.mxu0 0
      %2213 = vmatpush1.bf16.msra.mxu0 0
      %2214 = vmatprep.subr.bf16.mxu0 0
      %2215 = vmatpush1.bf16.msra.mxu0 0
      %2216 = vmatprep.subr.bf16.mxu0 0
      %2217 = vmatpush1.bf16.msra.mxu0 0
      %2218 = vmatprep.subr.bf16.mxu0 0
      %2219 = vmatpush1.bf16.msra.mxu0 0
      %2220 = vmatprep.subr.bf16.mxu0 0
      %2221 = vmatpush1.bf16.msra.mxu0 0
      %2222 = vmatprep.subr.bf16.mxu0 0
      %2223 = vmatpush1.bf16.msra.mxu0 0
      %2224 = vmatprep.subr.bf16.mxu0 0
      %2225 = vmatpush1.bf16.msra.mxu0 0
      %2226 = vmatprep.subr.bf16.mxu0 0
      %2227 = vmatpush1.bf16.msra.mxu0 0
      %2228 = vmatprep.subr.bf16.mxu0 0
      %2229 = vmatpush1.bf16.msra.mxu0 0
      %2230 = vmatprep.subr.bf16.mxu0 0
      %2231 = vmatpush1.bf16.msra.mxu0 0
      %2232 = vmatprep.mubr.bf16.mxu0 0
      %2233 = vmatmul.mubr.bf16.gmra.mrb[0].mxu0 %v2148
      %v2234 = vpop.f32.mrb[0].mxu0
      %v2235 = vadd.f32 0.0, %v2234
      %v2236 = vpop.f32.mrb[0].mxu0
      %v2237 = vpop.f32.mrb[0].mxu0
      %v2238 = vpop.f32.mrb[0].mxu0
      %2239 = vdwg.mxu0
      %v2240 = vadd.f32 %v2134, %v2194
      %v2241 = vadd.f32 %v2135, %v2196
      %v2242 = vadd.f32 %v2136, %v2235
      %v2243 = vld [vmem:[%s4] sm:$0xff]
      %2245 = vset.pattern.permute.xlu0 0
      %2246 = vperm.xlu0 %2245, %v2243
      %v2247 = vpop.permute.xlu0 %2246
      %v2249 = vadd.f32 %v2240, %v2247
      %v2250 = vadd.f32 %v2241, %v2247
      %v2251 = vadd.f32 %v2242, %v2247
      %v2252 = vmax.f32 %v2249, 0.0
      %v2253 = vmax.f32 %v2250, 0.0
      %v2254 = vmax.f32 %v2251, 0.0
      %2255 = vst [vmem:[%s224] sm:$0xff] %v2252
      %2256 = vst [vmem:[%s224 + $0x8] sm:$0xff] %v2253
      %vm2257 = vcmask 261120
      %2258 = vst.msk [vmem:[%s224 + $0x10] sm:$0xff] %vm2257, %v2254
      %p2259 = scmp.lt.s32.totalorder %s16, 1
      %s2260 = scalar_select %p2259, %s16, 1
      %s2261 = smul.addr %s2260, 3
      %s2262 = smul.addr %s2261, 8
      %s2263 = scalar_lea.vmem %s5, %s2262
      // Predicated region
      $region41: #{inconv_forward.1} parent=39 // pred_check
        %p2264 = pneg %p144
      $region42: #{inconv_forward.1} parent=39 // pred_check_branch
        %2266 = sbr.rel (%p2264) target = $region44
      $region43: #{inconv_forward.1} parent=39 // pred_region
        _
      $region44: #{inconv_forward.1} parent=39 // pred_fallthru
        _
    $region40: #{inconv_forward.1} parent=5 // pred_fallthru
      _
    %p2267 = scmp.le.s32.totalorder 2, %s11
    // Predicated region
    $region45: #{inconv_forward.1} parent=5 // pred_check
      %p2268 = pneg %p2267
    $region46: #{inconv_forward.1} parent=5 // pred_check_branch
      %2270 = sbr.rel (%p2268) target = $region48
    $region47: #{inconv_forward.1} parent=5 // pred_region
      %s2271 = ssub.s32 %s11, 2
      // Predicated region
      $region49: #{inconv_forward.1} parent=47 // pred_check
        %p2272 = pneg %p150
      $region50: #{inconv_forward.1} parent=47 // pred_check_branch
        %2274 = sbr.rel (%p2272) target = $region52
      $region51: #{inconv_forward.1} parent=47 // pred_region
        %p2275 = scmp.lt.s32.totalorder %s17, 1
        %s2276 = scalar_select %p2275, %s17, 1
        %s2277 = smul.addr %s2276, 3
        %s2278 = smul.addr %s2277, 8
        %s2279 = scalar_lea.vmem %s5, %s2278
      $region52: #{inconv_forward.1} parent=47 // pred_fallthru
        _
    $region48: #{inconv_forward.1} parent=5 // pred_fallthru
      _
  $region6: #{inconv_forward.1} parent=0 // loop_footer
    %s15 = sadd.s32 1, %s11
  $region7: #{inconv_forward.1} parent=0 // loop_footer_branch
    %10 = sbr.rel target = $region3
  $region8: #{inconv_forward.1} parent=0 // loop_exit
    _

</llo_original>
